<compile_context>
chip_gen: v5e
topology: v5e:2x2
jax: 0.10.0
libtpu: 0.0.40
codegen_flags: <defaults>
</compile_context>

<pallas_src>
import math

import jax
import jax.numpy as jnp
from jax.experimental import pallas as pl
from jax.experimental.pallas import tpu as pltpu

LANES = 128


# --------------------------------------------------------------------------- #
# Kernels
# --------------------------------------------------------------------------- #
def fused_kernel(x_ref, adjs_ref, w1_ref, b1_ref, w2_ref, b2_ref,
                 wla_ref, wlb_ref, bl_ref, out_ref):
    """Whole forward with both adjacencies VMEM-resident (single HBM read)."""
    # Shared first-layer support s1 = x @ W1, computed once as a prologue.
    s1 = jnp.dot(x_ref[...], w1_ref[...],
                 preferred_element_type=jnp.float32).astype(jnp.bfloat16)
    b1 = b1_ref[...]
    w2 = w2_ref[...]
    b2 = b2_ref[...]

    def branch(adj_b):
        h = jnp.dot(adj_b, s1, preferred_element_type=jnp.float32) + b1
        h = jnp.maximum(h, 0.0)
        s2 = jnp.dot(h, w2, preferred_element_type=jnp.float32)
        return jnp.dot(adj_b, s2.astype(jnp.bfloat16),
                       preferred_element_type=jnp.float32) + b2

    x1 = branch(adjs_ref[0])
    x2 = branch(adjs_ref[1])
    # Split linear instead of concat: cat([x1,x2]) @ Wl^T == x1 @ Wl_a + x2 @ Wl_b
    logits = (jnp.dot(x1, wla_ref[...], preferred_element_type=jnp.float32)
              + jnp.dot(x2, wlb_ref[...], preferred_element_type=jnp.float32)
              + bl_ref[...])
    m = jnp.max(logits, axis=1, keepdims=True)
    shifted = logits - m
    lse = jnp.log(jnp.sum(jnp.exp(shifted), axis=1, keepdims=True))
    out_ref[...] = (shifted - lse).astype(out_ref.dtype)


def hop1_kernel(adjs_ref, s1_ref, b1_ref, w2_ref, s2_ref):
    # adjs_ref: (2, tm, N) bf16 row tile covering BOTH branches (one stream).
    s1 = s1_ref[...]
    b1 = b1_ref[...]
    w2 = w2_ref[...]
    for b in range(2):                                   # static 2-way unroll
        h = jnp.dot(adjs_ref[b], s1, preferred_element_type=jnp.float32) + b1
        h = jnp.maximum(h, 0.0)
        s2 = jnp.dot(h, w2, preferred_element_type=jnp.float32)
        s2_ref[b] = s2.astype(s2_ref.dtype)


def hop2_kernel(adjs_ref, s2_ref, b2_ref, wla_ref, wlb_ref, bl_ref, out_ref):
    # adjs_ref: (2, tm, N) row tile (both branches); s2_ref: (2, N, 128) resident.
    b2 = b2_ref[...]
    x1 = jnp.dot(adjs_ref[0], s2_ref[0], preferred_element_type=jnp.float32) + b2
    x2 = jnp.dot(adjs_ref[1], s2_ref[1], preferred_element_type=jnp.float32) + b2
    logits = (jnp.dot(x1, wla_ref[...], preferred_element_type=jnp.float32)
              + jnp.dot(x2, wlb_ref[...], preferred_element_type=jnp.float32)
              + bl_ref[...])
    m = jnp.max(logits, axis=1, keepdims=True)
    shifted = logits - m
    lse = jnp.log(jnp.sum(jnp.exp(shifted), axis=1, keepdims=True))
    out_ref[...] = (shifted - lse).astype(out_ref.dtype)


# --------------------------------------------------------------------------- #
# Sizing helpers
# --------------------------------------------------------------------------- #
def _round_up(v, m):
    return (v + m - 1) // m * m


def _default_vmem_limit():
    """0.75 * per-core VMEM (leaves Mosaic scratch headroom; critical on v7x
    where a TensorCore only has 64 MiB).  Conservative fallback: 48 MiB."""
    try:
        cap = getattr(pltpu.get_tpu_info(), "vmem_capacity_bytes", None)
        if cap:
            return int(min(max(cap * 3 // 4, 32 * 1024 * 1024), 96 * 1024 * 1024))
    except Exception:
        pass
    return 48 * 1024 * 1024


def _pick_row_tile(n_rows, bytes_per_row, budget_bytes, requested=None,
                   max_tile=1024):
    """Largest row tile t dividing n_rows, preferring multiples of 256/128/16
    (bf16 sublane tile is (16,128); 256 fills MXU row blocks on v6e/v7x), such
    that a double-buffered tile (2 * t * bytes_per_row) stays under budget."""
    if requested is not None:
        assert requested % 8 == 0 and n_rows % requested == 0, (requested, n_rows)
        return requested
    cap = max(8, min(max_tile, n_rows, budget_bytes // (2 * bytes_per_row)))
    t = n_rows
    for align in (256, 128, 32, 16, 8):
        if n_rows % align:
            continue
        c = (cap // align) * align
        while c >= align and n_rows % c:
            c -= align
        if c >= align:
            t = c
            break
    # v7x has 2 TensorCores per chip: avoid 1-step grids when rows split evenly.
    if t == n_rows and t >= 32 and (t // 2) % 16 == 0:
        t //= 2
    return t


# --------------------------------------------------------------------------- #
# Wrapper
# --------------------------------------------------------------------------- #
def gnn_khop_forward(x, adj, adj2, params, *, row_tile=None,
                     vmem_limit_bytes=None, force_streaming=False):
    w1, b1, w2, b2, wl, bl = params
    N, nfeat = x.shape
    nhid = w1.shape[1]
    nhid2 = w2.shape[1]          # 32 in the module
    nclass = wl.shape[0]
    assert N % 8 == 0, "node count must be a multiple of 8 for dense row tiling"

    vmem_limit = int(vmem_limit_bytes) if vmem_limit_bytes else _default_vmem_limit()

    # Lane-pad hidden dims to 128 (zero padding is numerically exact).
    nhid_p = _round_up(nhid, LANES)
    nhid2_p = _round_up(nhid2, LANES)

    f32 = jnp.float32
    x = x.astype(f32)
    w1_p = jnp.zeros((nfeat, nhid_p), f32).at[:, :nhid].set(w1.astype(f32))
    b1_p = jnp.zeros((1, nhid_p), f32).at[:, :nhid].set(b1.astype(f32))
    w2_p = jnp.zeros((nhid_p, nhid2_p), f32).at[:nhid, :nhid2].set(w2.astype(f32))
    b2_p = jnp.zeros((1, nhid2_p), f32).at[:, :nhid2].set(b2.astype(f32))
    wl_t = wl.T.astype(f32)                                # (2*nhid2, nclass)
    wla_p = jnp.zeros((nhid2_p, nclass), f32).at[:nhid2].set(wl_t[:nhid2])
    wlb_p = jnp.zeros((nhid2_p, nclass), f32).at[:nhid2].set(wl_t[nhid2:])
    bl_2d = bl.reshape(1, nclass).astype(f32)

    # Stacked adjacency (2, N, N) in bf16 (single HBM operand for both
    # branches); f32 accumulation happens inside the kernels.
    adjs = jnp.stack([adj, adj2], axis=0).astype(jnp.bfloat16)

    vmem = pl.BlockSpec(memory_space=pltpu.MemorySpace.VMEM)
    out_shape = jax.ShapeDtypeStruct((N, nclass), f32)

    # ---------------- fused path: adjacency resident in VMEM -----------------
    # Conservative estimate: adjacency (+ possible slice copies) + f32 temps.
    fused_bytes = 3 * (2 * N * N * 2) + 8 * N * nhid_p * 4
    if not force_streaming and fused_bytes <= int(vmem_limit * 0.6):
        # TODO(synk): on v7x the fused call uses one TensorCore; the two
        # branches could be split across cores via pl.core_map.
        return pl.pallas_call(
            fused_kernel,
            out_shape=out_shape,
            in_specs=[vmem] * 9,
            out_specs=vmem,
            compiler_params=pltpu.CompilerParams(vmem_limit_bytes=vmem_limit),
        )(x, adjs, w1_p, b1_p, w2_p, b2_p, wla_p, wlb_p, bl_2d)

    # ---------------- streaming path: gridded over row tiles -----------------
    # s1 = x @ W1 is a tiny (N,nfeat)@(nfeat,128) matmul: plain XLA, no launch.
    s1 = jnp.dot(x, w1_p).astype(jnp.bfloat16)             # (N, nhid_p)

    work_budget = vmem_limit // 2      # headroom for value copies / outputs
    adj_row_bytes = 2 * N * 2          # both branches x N cols x bf16

    # hop1: s2_b = relu(adj_b @ s1 + b1) @ W2, both branches per grid step.
    resident1 = 2 * (N * nhid_p * 2) + 4 * nhid_p * (nhid2_p + 1)
    tm1 = _pick_row_tile(N, adj_row_bytes + 2 * nhid2_p * 2,
                         max(1 << 20, work_budget - resident1), row_tile)
    s2 = pl.pallas_call(
        hop1_kernel,
        out_shape=jax.ShapeDtypeStruct((2, N, nhid2_p), jnp.bfloat16),
        grid=(N // tm1,),
        in_specs=[
            pl.BlockSpec((2, tm1, N), lambda i: (0, i, 0)),      # adj rows (both)
            pl.BlockSpec((N, nhid_p), lambda i: (0, 0)),         # s1 (resident)
            pl.BlockSpec((1, nhid_p), lambda i: (0, 0)),         # b1
            pl.BlockSpec((nhid_p, nhid2_p), lambda i: (0, 0)),   # W2
        ],
        out_specs=pl.BlockSpec((2, tm1, nhid2_p), lambda i: (0, i, 0)),
        compiler_params=pltpu.CompilerParams(
            dimension_semantics=("parallel",),
            vmem_limit_bytes=vmem_limit),
    )(adjs, s1, b1_p, w2_p)

    # hop2 + split linear + log_softmax.
    resident2 = 2 * (2 * N * nhid2_p * 2) + 4 * nhid2_p * (2 * nclass + 1)
    tm2 = _pick_row_tile(N, adj_row_bytes + nclass * 4,
                         max(1 << 20, work_budget - resident2), row_tile)
    out = pl.pallas_call(
        hop2_kernel,
        out_shape=out_shape,
        grid=(N // tm2,),
        in_specs=[
            pl.BlockSpec((2, tm2, N), lambda i: (0, i, 0)),      # adj rows (both)
            pl.BlockSpec((2, N, nhid2_p), lambda i: (0, 0, 0)),  # s2 (resident)
            pl.BlockSpec((1, nhid2_p), lambda i: (0, 0)),        # b2
            pl.BlockSpec((nhid2_p, nclass), lambda i: (0, 0)),   # Wl_a
            pl.BlockSpec((nhid2_p, nclass), lambda i: (0, 0)),   # Wl_b
            pl.BlockSpec((1, nclass), lambda i: (0, 0)),         # bl
        ],
        out_specs=pl.BlockSpec((tm2, nclass), lambda i: (i, 0)),
        compiler_params=pltpu.CompilerParams(
            dimension_semantics=("parallel",),
            vmem_limit_bytes=vmem_limit),
    )(adjs, s2, b2_p, wla_p, wlb_p, bl_2d)
    return out


# --------------------------------------------------------------------------- #
# Params / reference
# --------------------------------------------------------------------------- #
def init_params(key, nfeat, nhid0, nclass):
    """Deterministic init mirroring the PyTorch module's parameter shapes."""
    k1, k2, k3, k4, k5, k6 = jax.random.split(key, 6)
    stdv1 = 1.0 / math.sqrt(nhid0)
    stdv2 = 1.0 / math.sqrt(32)
    w1 = jax.random.uniform(k1, (nfeat, nhid0), jnp.float32, -stdv1, stdv1)
    b1 = jax.random.uniform(k2, (nhid0,), jnp.float32, -stdv1, stdv1)
    w2 = jax.random.uniform(k3, (nhid0, 32), jnp.float32, -stdv2, stdv2)
    b2 = jax.random.uniform(k4, (32,), jnp.float32, -stdv2, stdv2)
    lin_bound = 1.0 / math.sqrt(32 * 2)
    wl = jax.random.uniform(k5, (nclass, 32 * 2), jnp.float32, -lin_bound, lin_bound)
    bl = jax.random.uniform(k6, (nclass,), jnp.float32, -lin_bound, lin_bound)
    return (w1, b1, w2, b2, wl, bl)


def reference_forward(x, adj, adj2, params):
    w1, b1, w2, b2, wl, bl = params

    def branch(a):
        h1 = jax.nn.relu(a @ (x @ w1) + b1)
        return a @ (h1 @ w2) + b2

    x1 = branch(adj)
    x2 = branch(adj2)
    logits = jnp.concatenate([x1, x2], axis=1) @ wl.T + bl
    return jax.nn.log_softmax(logits, axis=1)


if __name__ == "__main__":
    N, nfeat, nhid0, nclass = 256, 16, 32, 8
    key = jax.random.PRNGKey(0)
    kx, ka, ka2, kp = jax.random.split(key, 4)

    x = jax.random.normal(kx, (N, nfeat), jnp.float32)

    # Synthetic dense "sparse" adjacency matrices (row-normalized).
    def make_adj(k):
        a = (jax.random.uniform(k, (N, N)) < 0.1).astype(jnp.float32)
        a = a + jnp.eye(N, dtype=jnp.float32)
        return a / jnp.sum(a, axis=1, keepdims=True)

    adj = make_adj(ka)
    adj2 = make_adj(ka2)
    params = init_params(kp, nfeat, nhid0, nclass)

    ref = reference_forward(x, adj, adj2, params)

    # 1) fused path (adjacency VMEM-resident, single pallas_call).
    out_fused = jax.block_until_ready(gnn_khop_forward(x, adj, adj2, params))
    assert out_fused.shape == (N, nclass)
    err_f = float(jnp.max(jnp.abs(out_fused - ref)))
    assert jnp.allclose(out_fused, ref, atol=2e-3, rtol=2e-3), err_f

    # 2) streaming path (gridded hop1/hop2 with merged adjacency stream),
    #    exercised explicitly with row_tile=128 -> 2-step parallel grids.
    out_stream = jax.block_until_ready(
        gnn_khop_forward(x, adj, adj2, params, row_tile=128,
                         force_streaming=True))
    err_s = float(jnp.max(jnp.abs(out_stream - ref)))
    assert jnp.allclose(out_stream, ref, atol=2e-3, rtol=2e-3), err_s

    print("KERNEL_OK")
</pallas_src>

<mosaic_0001>
module attributes {stable_mosaic.version = 11 : i64} {
  func.func @fused_kernel(%arg0: memref<256x16xf32, #tpu.memory_space<vmem>>, %arg1: memref<2x256x256xbf16, #tpu.memory_space<vmem>>, %arg2: memref<16x128xf32, #tpu.memory_space<vmem>>, %arg3: memref<1x128xf32, #tpu.memory_space<vmem>>, %arg4: memref<128x128xf32, #tpu.memory_space<vmem>>, %arg5: memref<1x128xf32, #tpu.memory_space<vmem>>, %arg6: memref<128x8xf32, #tpu.memory_space<vmem>>, %arg7: memref<128x8xf32, #tpu.memory_space<vmem>>, %arg8: memref<1x8xf32, #tpu.memory_space<vmem>>, %arg9: memref<256x8xf32, #tpu.memory_space<vmem>>) attributes {dimension_semantics = [], scalar_prefetch = 0 : i64, scratch_operands = 0 : i64, tpu.core_type = #tpu.core_type<tc>} {
    %c0 = arith.constant 0 : index
    %c0_0 = arith.constant 0 : index
    %0 = vector.load %arg0[%c0, %c0_0] : memref<256x16xf32, #tpu.memory_space<vmem>>, vector<256x16xf32>
    %c0_1 = arith.constant 0 : index
    %c0_2 = arith.constant 0 : index
    %1 = vector.load %arg2[%c0_1, %c0_2] : memref<16x128xf32, #tpu.memory_space<vmem>>, vector<16x128xf32>
    %cst = arith.constant dense<0.000000e+00> : vector<256x128xf32>
    %2 = tpu.matmul %0, %1, %cst {dimension_numbers = #tpu.dot_dimension_numbers<[1], [0], [0], [1], [0, 0, 1, 1], [], []>} : vector<256x16xf32>, vector<16x128xf32>, vector<256x128xf32> -> vector<256x128xf32>
    %3 = arith.truncf %2 : vector<256x128xf32> to vector<256x128xbf16>
    %c0_3 = arith.constant 0 : index
    %c0_4 = arith.constant 0 : index
    %4 = vector.load %arg3[%c0_3, %c0_4] : memref<1x128xf32, #tpu.memory_space<vmem>>, vector<1x128xf32>
    %c0_5 = arith.constant 0 : index
    %c0_6 = arith.constant 0 : index
    %5 = vector.load %arg4[%c0_5, %c0_6] : memref<128x128xf32, #tpu.memory_space<vmem>>, vector<128x128xf32>
    %c0_7 = arith.constant 0 : index
    %c0_8 = arith.constant 0 : index
    %6 = vector.load %arg5[%c0_7, %c0_8] : memref<1x128xf32, #tpu.memory_space<vmem>>, vector<1x128xf32>
    %c0_9 = arith.constant 0 : index
    %c0_10 = arith.constant 0 : index
    %c0_11 = arith.constant 0 : index
    %7 = vector.load %arg1[%c0_9, %c0_10, %c0_11] : memref<2x256x256xbf16, #tpu.memory_space<vmem>>, vector<1x256x256xbf16>
    %8 = vector.shape_cast %7 : vector<1x256x256xbf16> to vector<256x256xbf16>
    %cst_12 = arith.constant dense<0.000000e+00> : vector<256x128xf32>
    %9 = tpu.matmul %8, %3, %cst_12 {dimension_numbers = #tpu.dot_dimension_numbers<[1], [0], [0], [1], [0, 0, 1, 1], [], []>} : vector<256x256xbf16>, vector<256x128xbf16>, vector<256x128xf32> -> vector<256x128xf32>
    %10 = vector.broadcast %4 : vector<1x128xf32> to vector<256x128xf32>
    %11 = arith.addf %9, %10 : vector<256x128xf32>
    %cst_13 = arith.constant 0.000000e+00 : f32
    %12 = vector.broadcast %cst_13 : f32 to vector<256x128xf32>
    %13 = arith.maximumf %11, %12 : vector<256x128xf32>
    %cst_14 = arith.constant dense<0.000000e+00> : vector<256x128xf32>
    %14 = tpu.matmul %13, %5, %cst_14 {dimension_numbers = #tpu.dot_dimension_numbers<[1], [0], [0], [1], [0, 0, 1, 1], [], []>} : vector<256x128xf32>, vector<128x128xf32>, vector<256x128xf32> -> vector<256x128xf32>
    %15 = arith.truncf %14 : vector<256x128xf32> to vector<256x128xbf16>
    %cst_15 = arith.constant dense<0.000000e+00> : vector<256x128xf32>
    %16 = tpu.matmul %8, %15, %cst_15 {dimension_numbers = #tpu.dot_dimension_numbers<[1], [0], [0], [1], [0, 0, 1, 1], [], []>} : vector<256x256xbf16>, vector<256x128xbf16>, vector<256x128xf32> -> vector<256x128xf32>
    %17 = vector.broadcast %6 : vector<1x128xf32> to vector<256x128xf32>
    %18 = arith.addf %16, %17 : vector<256x128xf32>
    %c1 = arith.constant 1 : index
    %c0_16 = arith.constant 0 : index
    %c0_17 = arith.constant 0 : index
    %19 = vector.load %arg1[%c1, %c0_16, %c0_17] : memref<2x256x256xbf16, #tpu.memory_space<vmem>>, vector<1x256x256xbf16>
    %20 = vector.shape_cast %19 : vector<1x256x256xbf16> to vector<256x256xbf16>
    %cst_18 = arith.constant dense<0.000000e+00> : vector<256x128xf32>
    %21 = tpu.matmul %20, %3, %cst_18 {dimension_numbers = #tpu.dot_dimension_numbers<[1], [0], [0], [1], [0, 0, 1, 1], [], []>} : vector<256x256xbf16>, vector<256x128xbf16>, vector<256x128xf32> -> vector<256x128xf32>
    %22 = vector.broadcast %4 : vector<1x128xf32> to vector<256x128xf32>
    %23 = arith.addf %21, %22 : vector<256x128xf32>
    %cst_19 = arith.constant 0.000000e+00 : f32
    %24 = vector.broadcast %cst_19 : f32 to vector<256x128xf32>
    %25 = arith.maximumf %23, %24 : vector<256x128xf32>
    %cst_20 = arith.constant dense<0.000000e+00> : vector<256x128xf32>
    %26 = tpu.matmul %25, %5, %cst_20 {dimension_numbers = #tpu.dot_dimension_numbers<[1], [0], [0], [1], [0, 0, 1, 1], [], []>} : vector<256x128xf32>, vector<128x128xf32>, vector<256x128xf32> -> vector<256x128xf32>
    %27 = arith.truncf %26 : vector<256x128xf32> to vector<256x128xbf16>
    %cst_21 = arith.constant dense<0.000000e+00> : vector<256x128xf32>
    %28 = tpu.matmul %20, %27, %cst_21 {dimension_numbers = #tpu.dot_dimension_numbers<[1], [0], [0], [1], [0, 0, 1, 1], [], []>} : vector<256x256xbf16>, vector<256x128xbf16>, vector<256x128xf32> -> vector<256x128xf32>
    %29 = vector.broadcast %6 : vector<1x128xf32> to vector<256x128xf32>
    %30 = arith.addf %28, %29 : vector<256x128xf32>
    %c0_22 = arith.constant 0 : index
    %c0_23 = arith.constant 0 : index
    %31 = vector.load %arg6[%c0_22, %c0_23] : memref<128x8xf32, #tpu.memory_space<vmem>>, vector<128x8xf32>
    %cst_24 = arith.constant dense<0.000000e+00> : vector<256x8xf32>
    %32 = tpu.matmul %18, %31, %cst_24 {dimension_numbers = #tpu.dot_dimension_numbers<[1], [0], [0], [1], [0, 0, 1, 1], [], []>} : vector<256x128xf32>, vector<128x8xf32>, vector<256x8xf32> -> vector<256x8xf32>
    %c0_25 = arith.constant 0 : index
    %c0_26 = arith.constant 0 : index
    %33 = vector.load %arg7[%c0_25, %c0_26] : memref<128x8xf32, #tpu.memory_space<vmem>>, vector<128x8xf32>
    %cst_27 = arith.constant dense<0.000000e+00> : vector<256x8xf32>
    %34 = tpu.matmul %30, %33, %cst_27 {dimension_numbers = #tpu.dot_dimension_numbers<[1], [0], [0], [1], [0, 0, 1, 1], [], []>} : vector<256x128xf32>, vector<128x8xf32>, vector<256x8xf32> -> vector<256x8xf32>
    %35 = arith.addf %32, %34 : vector<256x8xf32>
    %c0_28 = arith.constant 0 : index
    %c0_29 = arith.constant 0 : index
    %36 = vector.load %arg8[%c0_28, %c0_29] : memref<1x8xf32, #tpu.memory_space<vmem>>, vector<1x8xf32>
    %37 = vector.broadcast %36 : vector<1x8xf32> to vector<256x8xf32>
    %38 = arith.addf %35, %37 : vector<256x8xf32>
    %cst_30 = arith.constant dense<0xFF800000> : vector<256xf32>
    %39 = vector.multi_reduction <maximumf>, %38, %cst_30 [1] : vector<256x8xf32> to vector<256xf32>
    %40 = vector.shape_cast %39 : vector<256xf32> to vector<256x1xf32>
    %41 = vector.broadcast %40 : vector<256x1xf32> to vector<256x8xf32>
    %42 = arith.subf %38, %41 : vector<256x8xf32>
    %43 = math.exp %42 : vector<256x8xf32>
    %cst_31 = arith.constant dense<0.000000e+00> : vector<256xf32>
    %44 = vector.multi_reduction <add>, %43, %cst_31 [1] : vector<256x8xf32> to vector<256xf32>
    %45 = vector.shape_cast %44 : vector<256xf32> to vector<256x1xf32>
    %46 = math.log %45 : vector<256x1xf32>
    %47 = vector.broadcast %46 : vector<256x1xf32> to vector<256x8xf32>
    %48 = arith.subf %42, %47 : vector<256x8xf32>
    %c0_32 = arith.constant 0 : index
    %c0_33 = arith.constant 0 : index
    %49 = vector.load %arg9[%c0_32, %c0_33] : memref<256x8xf32, #tpu.memory_space<vmem>>, vector<256x8xf32>
    tpu.vector_store %arg9[%c0_32, %c0_33], %48 {strides = array<i32>} : memref<256x8xf32, #tpu.memory_space<vmem>>, vector<256x8xf32>,
    return
  }
}

</mosaic_0001>

<llo_original>
// kernel: tpu_custom_call.1
$region0: #{tpu_custom_call.1}
  #allocation0 [shape = 'u32[]', space=smem, size = 0x4, offset = 0x4, fixed_abs, tag = 'smem constant byte address 0x4 - core index']
  #allocation1 [shape = 'u32[72,128]{1,0:T(1,128)}', space=vmem, size = 0x9000, scoped, tag = 'internal scratch']
  %s0 = inlined_call_operand.vmem [shape: f32[256,16], index: 0, kind: input, shape index: {}]
  %s1 = inlined_call_operand.hbm [shape: bf16[2,256,256], index: 1, kind: input, shape index: {}]
  %s2 = inlined_call_operand.vmem [shape: f32[16,128], index: 2, kind: input, shape index: {}]
  %s3 = inlined_call_operand.vmem [shape: f32[1,128], index: 3, kind: input, shape index: {}]
  %s4 = inlined_call_operand.vmem [shape: f32[128,128], index: 4, kind: input, shape index: {}]
  %s5 = inlined_call_operand.vmem [shape: f32[1,128], index: 5, kind: input, shape index: {}]
  %s6 = inlined_call_operand.vmem [shape: f32[128,8], index: 6, kind: input, shape index: {}]
  %s7 = inlined_call_operand.vmem [shape: f32[128,8], index: 7, kind: input, shape index: {}]
  %s8 = inlined_call_operand.vmem [shape: f32[1,8], index: 8, kind: input, shape index: {}]
  %s9 = inlined_call_operand.vmem [shape: f32[256,8], index: 9, kind: output, shape index: {}]
  %s10 = sld [smem:[#allocation0]]
  $region50: #{tpu_custom_call.1} parent=0
    _
  %s12 = ssub.s32 1, %s10
  %s13 = scalar_select 0, %s12, %s10
  $region1: #{tpu_custom_call.1} parent=0
    #allocation2 [shape = 'u8[262144]{0}', space=vmem, size = 0x40000, scoped, tag = 'input window, operand 1, single buffered']
    #allocation3 [shape = 's32[1]{0}', space=sflag, size = 0x4, scoped, tag = 'scoped memory for tpu_custom_call.1']
    %14 = vsyncpa [#allocation3], 0
    // Predicated region
    $region2: #{tpu_custom_call.1} parent=1 // pred_check
      _
    $region3: #{tpu_custom_call.1} parent=1 // pred_check_branch
      %16 = sbr.rel (0) target = $region5
    $region4: #{tpu_custom_call.1} parent=1 // pred_region
      _
    $region5: #{tpu_custom_call.1} parent=1 // pred_fallthru
      _
    // Predicated region
    $region6: #{tpu_custom_call.1} parent=1 // pred_check
      _
    $region7: #{tpu_custom_call.1} parent=1 // pred_check_branch
      %18 = sbr.rel (0) target = $region9
    $region8: #{tpu_custom_call.1} parent=1 // pred_region
      %20 = vsyncadd [#allocation3], 0
      %s21 = sshll.u32 %s1, 4
      %s22 = int_to_ptr.hbm [resolvable:$true] %s21
      %s23 = sshll.u32 [#allocation2], 4
      %s24 = int_to_ptr.vmem [resolvable:$true] %s23
      %29 = dma.hbm_to_vmem [thread:$0]  %s22, 8192, %s24, [#allocation3], 128, 128, 8
    $region9: #{tpu_custom_call.1} parent=1 // pred_fallthru
      _
    // Predicated region
    $region10: #{tpu_custom_call.1} parent=1 // pred_check
      _
    $region11: #{tpu_custom_call.1} parent=1 // pred_check_branch
      %31 = sbr.rel (0) target = $region13
    $region12: #{tpu_custom_call.1} parent=1 // pred_region
      _
    $region13: #{tpu_custom_call.1} parent=1 // pred_fallthru
      _
    // Predicated region
    $region14: #{tpu_custom_call.1} parent=1 // pred_check
      _
    $region15: #{tpu_custom_call.1} parent=1 // pred_check_branch
      %33 = sbr.rel (0) target = $region17
    $region16: #{tpu_custom_call.1} parent=1 // pred_region
      _
    $region17: #{tpu_custom_call.1} parent=1 // pred_fallthru
      _
    // Predicated region
    $region18: #{tpu_custom_call.1} parent=1 // pred_check
      _
    $region19: #{tpu_custom_call.1} parent=1 // pred_check_branch
      %35 = sbr.rel (0) target = $region21
    $region20: #{tpu_custom_call.1} parent=1 // pred_region
      _
    $region21: #{tpu_custom_call.1} parent=1 // pred_fallthru
      _
    // Predicated region
    $region22: #{tpu_custom_call.1} parent=1 // pred_check
      _
    $region23: #{tpu_custom_call.1} parent=1 // pred_check_branch
      %37 = sbr.rel (0) target = $region25
    $region24: #{tpu_custom_call.1} parent=1 // pred_region
      _
    $region25: #{tpu_custom_call.1} parent=1 // pred_fallthru
      _
    // Predicated region
    $region26: #{tpu_custom_call.1} parent=1 // pred_check
      _
    $region27: #{tpu_custom_call.1} parent=1 // pred_check_branch
      %39 = sbr.rel (0) target = $region29
    $region28: #{tpu_custom_call.1} parent=1 // pred_region
      _
    $region29: #{tpu_custom_call.1} parent=1 // pred_fallthru
      _
    // Predicated region
    $region30: #{tpu_custom_call.1} parent=1 // pred_check
      _
    $region31: #{tpu_custom_call.1} parent=1 // pred_check_branch
      %41 = sbr.rel (0) target = $region33
    $region32: #{tpu_custom_call.1} parent=1 // pred_region
      _
    $region33: #{tpu_custom_call.1} parent=1 // pred_fallthru
      _
    // Predicated region
    $region34: #{tpu_custom_call.1} parent=1 // pred_check
      _
    $region35: #{tpu_custom_call.1} parent=1 // pred_check_branch
      %43 = sbr.rel (0) target = $region37
    $region36: #{tpu_custom_call.1} parent=1 // pred_region
      _
    $region37: #{tpu_custom_call.1} parent=1 // pred_fallthru
      _
    // Predicated region
    $region38: #{tpu_custom_call.1} parent=1 // pred_check
      _
    $region39: #{tpu_custom_call.1} parent=1 // pred_check_branch
      %45 = sbr.rel (0) target = $region41
    $region40: #{tpu_custom_call.1} parent=1 // pred_region
      %47 = dma.done [#allocation3], 8192
    $region41: #{tpu_custom_call.1} parent=1 // pred_fallthru
      _
    %v48 = vld [vmem:[%s0] sm:$0xff]
    %v49 = vld [vmem:[%s0 + $0x8] sm:$0xff]
    %v50 = vld [vmem:[%s0 + $0x10] sm:$0xff]
    %v51 = vld [vmem:[%s0 + $0x18] sm:$0xff]
    %v52 = vld [vmem:[%s0 + $0x20] sm:$0xff]
    %v53 = vld [vmem:[%s0 + $0x28] sm:$0xff]
    %v54 = vld [vmem:[%s0 + $0x30] sm:$0xff]
    %v55 = vld [vmem:[%s0 + $0x38] sm:$0xff]
    %v56 = vld [vmem:[%s0 + $0x40] sm:$0xff]
    %v57 = vld [vmem:[%s0 + $0x48] sm:$0xff]
    %v58 = vld [vmem:[%s0 + $0x50] sm:$0xff]
    %v59 = vld [vmem:[%s0 + $0x58] sm:$0xff]
    %v60 = vld [vmem:[%s0 + $0x60] sm:$0xff]
    %v61 = vld [vmem:[%s0 + $0x68] sm:$0xff]
    %v62 = vld [vmem:[%s0 + $0x70] sm:$0xff]
    %v63 = vld [vmem:[%s0 + $0x78] sm:$0xff]
    %v64 = vld [vmem:[%s0 + $0x80] sm:$0xff]
    %v65 = vld [vmem:[%s0 + $0x88] sm:$0xff]
    %v66 = vld [vmem:[%s0 + $0x90] sm:$0xff]
    %v67 = vld [vmem:[%s0 + $0x98] sm:$0xff]
    %v68 = vld [vmem:[%s0 + $0xa0] sm:$0xff]
    %v69 = vld [vmem:[%s0 + $0xa8] sm:$0xff]
    %v70 = vld [vmem:[%s0 + $0xb0] sm:$0xff]
    %v71 = vld [vmem:[%s0 + $0xb8] sm:$0xff]
    %v72 = vld [vmem:[%s0 + $0xc0] sm:$0xff]
    %v73 = vld [vmem:[%s0 + $0xc8] sm:$0xff]
    %v74 = vld [vmem:[%s0 + $0xd0] sm:$0xff]
    %v75 = vld [vmem:[%s0 + $0xd8] sm:$0xff]
    %v76 = vld [vmem:[%s0 + $0xe0] sm:$0xff]
    %v77 = vld [vmem:[%s0 + $0xe8] sm:$0xff]
    %v78 = vld [vmem:[%s0 + $0xf0] sm:$0xff]
    %v79 = vld [vmem:[%s0 + $0xf8] sm:$0xff]
    %v80 = vld [vmem:[%s2] sm:$0xff]
    %v81 = vld [vmem:[%s2 + $0x8] sm:$0xff]
    %vm82 = vcmask 130048
    %v84 = vsel %vm82, %v48, 0
    %v87 = vsel %vm82, %v49, 0
    %v90 = vsel %vm82, %v50, 0
    %v93 = vsel %vm82, %v51, 0
    %v96 = vsel %vm82, %v52, 0
    %v99 = vsel %vm82, %v53, 0
    %v102 = vsel %vm82, %v54, 0
    %v105 = vsel %vm82, %v55, 0
    %v108 = vsel %vm82, %v56, 0
    %v111 = vsel %vm82, %v57, 0
    %v114 = vsel %vm82, %v58, 0
    %v117 = vsel %vm82, %v59, 0
    %v120 = vsel %vm82, %v60, 0
    %v123 = vsel %vm82, %v61, 0
    %v126 = vsel %vm82, %v62, 0
    %v129 = vsel %vm82, %v63, 0
    %v132 = vsel %vm82, %v64, 0
    %v135 = vsel %vm82, %v65, 0
    %v138 = vsel %vm82, %v66, 0
    %v141 = vsel %vm82, %v67, 0
    %v144 = vsel %vm82, %v68, 0
    %v147 = vsel %vm82, %v69, 0
    %v150 = vsel %vm82, %v70, 0
    %v153 = vsel %vm82, %v71, 0
    %v156 = vsel %vm82, %v72, 0
    %v159 = vsel %vm82, %v73, 0
    %v162 = vsel %vm82, %v74, 0
    %v165 = vsel %vm82, %v75, 0
    %v168 = vsel %vm82, %v76, 0
    %v171 = vsel %vm82, %v77, 0
    %v174 = vsel %vm82, %v78, 0
    %v177 = vsel %vm82, %v79, 0
    %179 = vmatpush.msra.mxu0 0.0
    %180 = vmatpush.msra.mxu0 0.0
    %181 = vmatpush.msra.mxu0 0.0
    %182 = vmatpush.msra.mxu0 0.0
    %183 = vmatpush.msra.mxu0 0.0
    %184 = vmatpush.msra.mxu0 0.0
    %185 = vmatpush.msra.mxu0 0.0
    %186 = vmatpush.msra.mxu0 0.0
    %187 = vmatpush.msra.mxu0 0.0
    %188 = vmatpush.msra.mxu0 0.0
    %189 = vmatpush.msra.mxu0 0.0
    %190 = vmatpush.msra.mxu0 0.0
    %191 = vmatpush.msra.mxu0 0.0
    %192 = vmatpush.msra.mxu0 0.0
    %193 = vmatpush.msra.mxu0 %v81
    %194 = vmatpush.msra.mxu0 %v80
    %195 = vmatmul.f32.gmra.mxu0 %v84
    %v196 = vpop.f32.mrf.mxu0
    %v197 = vadd.f32 0.0, %v196
    %198 = vmatmul.f32.gmra.mxu0 %v87
    %v199 = vpop.f32.mrf.mxu0
    %v200 = vadd.f32 0.0, %v199
    %201 = vmatmul.f32.gmra.mxu0 %v90
    %v202 = vpop.f32.mrf.mxu0
    %v203 = vadd.f32 0.0, %v202
    %204 = vmatmul.f32.gmra.mxu0 %v93
    %v205 = vpop.f32.mrf.mxu0
    %v206 = vadd.f32 0.0, %v205
    %207 = vmatmul.f32.gmra.mxu0 %v96
    %v208 = vpop.f32.mrf.mxu0
    %v209 = vadd.f32 0.0, %v208
    %210 = vmatmul.f32.gmra.mxu0 %v99
    %v211 = vpop.f32.mrf.mxu0
    %v212 = vadd.f32 0.0, %v211
    %213 = vmatmul.f32.gmra.mxu0 %v102
    %v214 = vpop.f32.mrf.mxu0
    %v215 = vadd.f32 0.0, %v214
    %216 = vmatmul.f32.gmra.mxu0 %v105
    %v217 = vpop.f32.mrf.mxu0
    %v218 = vadd.f32 0.0, %v217
    %219 = vmatmul.f32.gmra.mxu0 %v108
    %v220 = vpop.f32.mrf.mxu0
    %v221 = vadd.f32 0.0, %v220
    %222 = vmatmul.f32.gmra.mxu0 %v111
    %v223 = vpop.f32.mrf.mxu0
    %v224 = vadd.f32 0.0, %v223
    %225 = vmatmul.f32.gmra.mxu0 %v114
    %v226 = vpop.f32.mrf.mxu0
    %v227 = vadd.f32 0.0, %v226
    %228 = vmatmul.f32.gmra.mxu0 %v117
    %v229 = vpop.f32.mrf.mxu0
    %v230 = vadd.f32 0.0, %v229
    %231 = vmatmul.f32.gmra.mxu0 %v120
    %v232 = vpop.f32.mrf.mxu0
    %v233 = vadd.f32 0.0, %v232
    %234 = vmatmul.f32.gmra.mxu0 %v123
    %v235 = vpop.f32.mrf.mxu0
    %v236 = vadd.f32 0.0, %v235
    %237 = vmatmul.f32.gmra.mxu0 %v126
    %v238 = vpop.f32.mrf.mxu0
    %v239 = vadd.f32 0.0, %v238
    %240 = vmatmul.f32.gmra.mxu0 %v129
    %v241 = vpop.f32.mrf.mxu0
    %v242 = vadd.f32 0.0, %v241
    %243 = vmatmul.f32.gmra.mxu0 %v132
    %v244 = vpop.f32.mrf.mxu0
    %v245 = vadd.f32 0.0, %v244
    %246 = vmatmul.f32.gmra.mxu0 %v135
    %v247 = vpop.f32.mrf.mxu0
    %v248 = vadd.f32 0.0, %v247
    %249 = vmatmul.f32.gmra.mxu0 %v138
    %v250 = vpop.f32.mrf.mxu0
    %v251 = vadd.f32 0.0, %v250
    %252 = vmatmul.f32.gmra.mxu0 %v141
    %v253 = vpop.f32.mrf.mxu0
    %v254 = vadd.f32 0.0, %v253
    %255 = vmatmul.f32.gmra.mxu0 %v144
    %v256 = vpop.f32.mrf.mxu0
    %v257 = vadd.f32 0.0, %v256
    %258 = vmatmul.f32.gmra.mxu0 %v147
    %v259 = vpop.f32.mrf.mxu0
    %v260 = vadd.f32 0.0, %v259
    %261 = vmatmul.f32.gmra.mxu0 %v150
    %v262 = vpop.f32.mrf.mxu0
    %v263 = vadd.f32 0.0, %v262
    %264 = vmatmul.f32.gmra.mxu0 %v153
    %v265 = vpop.f32.mrf.mxu0
    %v266 = vadd.f32 0.0, %v265
    %267 = vmatmul.f32.gmra.mxu0 %v156
    %v268 = vpop.f32.mrf.mxu0
    %v269 = vadd.f32 0.0, %v268
    %270 = vmatmul.f32.gmra.mxu0 %v159
    %v271 = vpop.f32.mrf.mxu0
    %v272 = vadd.f32 0.0, %v271
    %273 = vmatmul.f32.gmra.mxu0 %v162
    %v274 = vpop.f32.mrf.mxu0
    %v275 = vadd.f32 0.0, %v274
    %276 = vmatmul.f32.gmra.mxu0 %v165
    %v277 = vpop.f32.mrf.mxu0
    %v278 = vadd.f32 0.0, %v277
    %279 = vmatmul.f32.gmra.mxu0 %v168
    %v280 = vpop.f32.mrf.mxu0
    %v281 = vadd.f32 0.0, %v280
    %282 = vmatmul.f32.gmra.mxu0 %v171
    %v283 = vpop.f32.mrf.mxu0
    %v284 = vadd.f32 0.0, %v283
    %285 = vmatmul.f32.gmra.mxu0 %v174
    %v286 = vpop.f32.mrf.mxu0
    %v287 = vadd.f32 0.0, %v286
    %288 = vmatmul.f32.gmra.mxu0 %v177
    %v289 = vpop.f32.mrf.mxu0
    %v290 = vadd.f32 0.0, %v289
    %291 = vdwg.mxu0
    %v292 = vpack.c.bf16 %v200, %v197
    %v293 = vpack.c.bf16 %v206, %v203
    %v294 = vpack.c.bf16 %v212, %v209
    %v295 = vpack.c.bf16 %v218, %v215
    %v296 = vpack.c.bf16 %v224, %v221
    %v297 = vpack.c.bf16 %v230, %v227
    %v298 = vpack.c.bf16 %v236, %v233
    %v299 = vpack.c.bf16 %v242, %v239
    %v300 = vpack.c.bf16 %v248, %v245
    %v301 = vpack.c.bf16 %v254, %v251
    %v302 = vpack.c.bf16 %v260, %v257
    %v303 = vpack.c.bf16 %v266, %v263
    %v304 = vpack.c.bf16 %v272, %v269
    %v305 = vpack.c.bf16 %v278, %v275
    %v306 = vpack.c.bf16 %v284, %v281
    %v307 = vpack.c.bf16 %v290, %v287
    %v308 = vld [vmem:[%s3] sm:$0x1]
    %v309 = vld [vmem:[%s4] sm:$0xff]
    %v310 = vld [vmem:[%s4 + $0x8] sm:$0xff]
    %v311 = vld [vmem:[%s4 + $0x10] sm:$0xff]
    %v312 = vld [vmem:[%s4 + $0x18] sm:$0xff]
    %v313 = vld [vmem:[%s4 + $0x20] sm:$0xff]
    %v314 = vld [vmem:[%s4 + $0x28] sm:$0xff]
    %v315 = vld [vmem:[%s4 + $0x30] sm:$0xff]
    %v316 = vld [vmem:[%s4 + $0x38] sm:$0xff]
    %v317 = vld [vmem:[%s4 + $0x40] sm:$0xff]
    %v318 = vld [vmem:[%s4 + $0x48] sm:$0xff]
    %v319 = vld [vmem:[%s4 + $0x50] sm:$0xff]
    %v320 = vld [vmem:[%s4 + $0x58] sm:$0xff]
    %v321 = vld [vmem:[%s4 + $0x60] sm:$0xff]
    %v322 = vld [vmem:[%s4 + $0x68] sm:$0xff]
    %v323 = vld [vmem:[%s4 + $0x70] sm:$0xff]
    %v324 = vld [vmem:[%s4 + $0x78] sm:$0xff]
    %v325 = vld [vmem:[%s5] sm:$0x1]
    %v326 = vld [vmem:[#allocation2] sm:$0xff]
    %v327 = vld [vmem:[#allocation2 + $0x8] sm:$0xff]
    %v328 = vld [vmem:[#allocation2 + $0x10] sm:$0xff]
    %v329 = vld [vmem:[#allocation2 + $0x18] sm:$0xff]
    %v330 = vld [vmem:[#allocation2 + $0x20] sm:$0xff]
    %v331 = vld [vmem:[#allocation2 + $0x28] sm:$0xff]
    %v332 = vld [vmem:[#allocation2 + $0x30] sm:$0xff]
    %v333 = vld [vmem:[#allocation2 + $0x38] sm:$0xff]
    %v334 = vld [vmem:[#allocation2 + $0x40] sm:$0xff]
    %v335 = vld [vmem:[#allocation2 + $0x48] sm:$0xff]
    %v336 = vld [vmem:[#allocation2 + $0x50] sm:$0xff]
    %v337 = vld [vmem:[#allocation2 + $0x58] sm:$0xff]
    %v338 = vld [vmem:[#allocation2 + $0x60] sm:$0xff]
    %v339 = vld [vmem:[#allocation2 + $0x68] sm:$0xff]
    %v340 = vld [vmem:[#allocation2 + $0x70] sm:$0xff]
    %v341 = vld [vmem:[#allocation2 + $0x78] sm:$0xff]
    %v342 = vld [vmem:[#allocation2 + $0x80] sm:$0xff]
    %v343 = vld [vmem:[#allocation2 + $0x88] sm:$0xff]
    %v344 = vld [vmem:[#allocation2 + $0x90] sm:$0xff]
    %v345 = vld [vmem:[#allocation2 + $0x98] sm:$0xff]
    %v346 = vld [vmem:[#allocation2 + $0xa0] sm:$0xff]
    %v347 = vld [vmem:[#allocation2 + $0xa8] sm:$0xff]
    %v348 = vld [vmem:[#allocation2 + $0xb0] sm:$0xff]
    %v349 = vld [vmem:[#allocation2 + $0xb8] sm:$0xff]
    %v350 = vld [vmem:[#allocation2 + $0xc0] sm:$0xff]
    %v351 = vld [vmem:[#allocation2 + $0xc8] sm:$0xff]
    %v352 = vld [vmem:[#allocation2 + $0xd0] sm:$0xff]
    %v353 = vld [vmem:[#allocation2 + $0xd8] sm:$0xff]
    %v354 = vld [vmem:[#allocation2 + $0xe0] sm:$0xff]
    %v355 = vld [vmem:[#allocation2 + $0xe8] sm:$0xff]
    %v356 = vld [vmem:[#allocation2 + $0xf0] sm:$0xff]
    %v357 = vld [vmem:[#allocation2 + $0xf8] sm:$0xff]
    %v359 = vperm.slane %v308, 0
    %v393 = vunpack.c.l.b16 %v326
    %v394 = vunpack.c.h.b16 %v326
    %v395 = vunpack.c.l.b16 %v327
    %v396 = vunpack.c.h.b16 %v327
    %v397 = vunpack.c.l.b16 %v328
    %v398 = vunpack.c.h.b16 %v328
    %v399 = vunpack.c.l.b16 %v329
    %v400 = vunpack.c.h.b16 %v329
    %v401 = vunpack.c.l.b16 %v330
    %v402 = vunpack.c.h.b16 %v330
    %v403 = vunpack.c.l.b16 %v331
    %v404 = vunpack.c.h.b16 %v331
    %v405 = vunpack.c.l.b16 %v332
    %v406 = vunpack.c.h.b16 %v332
    %v407 = vunpack.c.l.b16 %v333
    %v408 = vunpack.c.h.b16 %v333
    %v409 = vunpack.c.l.b16 %v334
    %v410 = vunpack.c.h.b16 %v334
    %v411 = vunpack.c.l.b16 %v335
    %v412 = vunpack.c.h.b16 %v335
    %v413 = vunpack.c.l.b16 %v336
    %v414 = vunpack.c.h.b16 %v336
    %v415 = vunpack.c.l.b16 %v337
    %v416 = vunpack.c.h.b16 %v337
    %v417 = vunpack.c.l.b16 %v338
    %v418 = vunpack.c.h.b16 %v338
    %v419 = vunpack.c.l.b16 %v339
    %v420 = vunpack.c.h.b16 %v339
    %v421 = vunpack.c.l.b16 %v340
    %v422 = vunpack.c.h.b16 %v340
    %v423 = vunpack.c.l.b16 %v341
    %v424 = vunpack.c.h.b16 %v341
    %v425 = vunpack.c.l.b16 %v342
    %v426 = vunpack.c.h.b16 %v342
    %v427 = vunpack.c.l.b16 %v343
    %v428 = vunpack.c.h.b16 %v343
    %v429 = vunpack.c.l.b16 %v344
    %v430 = vunpack.c.h.b16 %v344
    %v431 = vunpack.c.l.b16 %v345
    %v432 = vunpack.c.h.b16 %v345
    %v433 = vunpack.c.l.b16 %v346
    %v434 = vunpack.c.h.b16 %v346
    %v435 = vunpack.c.l.b16 %v347
    %v436 = vunpack.c.h.b16 %v347
    %v437 = vunpack.c.l.b16 %v348
    %v438 = vunpack.c.h.b16 %v348
    %v439 = vunpack.c.l.b16 %v349
    %v440 = vunpack.c.h.b16 %v349
    %v441 = vunpack.c.l.b16 %v350
    %v442 = vunpack.c.h.b16 %v350
    %v443 = vunpack.c.l.b16 %v351
    %v444 = vunpack.c.h.b16 %v351
    %v445 = vunpack.c.l.b16 %v352
    %v446 = vunpack.c.h.b16 %v352
    %v447 = vunpack.c.l.b16 %v353
    %v448 = vunpack.c.h.b16 %v353
    %v449 = vunpack.c.l.b16 %v354
    %v450 = vunpack.c.h.b16 %v354
    %v451 = vunpack.c.l.b16 %v355
    %v452 = vunpack.c.h.b16 %v355
    %v453 = vunpack.c.l.b16 %v356
    %v454 = vunpack.c.h.b16 %v356
    %v455 = vunpack.c.l.b16 %v357
    %v456 = vunpack.c.h.b16 %v357
    %v457 = vpack.c.b16 %v395, %v393
    %v458 = vpack.c.b16 %v396, %v394
    %v459 = vpack.c.b16 %v399, %v397
    %v460 = vpack.c.b16 %v400, %v398
    %v461 = vpack.c.b16 %v403, %v401
    %v462 = vpack.c.b16 %v404, %v402
    %v463 = vpack.c.b16 %v407, %v405
    %v464 = vpack.c.b16 %v408, %v406
    %v465 = vpack.c.b16 %v411, %v409
    %v466 = vpack.c.b16 %v412, %v410
    %v467 = vpack.c.b16 %v415, %v413
    %v468 = vpack.c.b16 %v416, %v414
    %v469 = vpack.c.b16 %v419, %v417
    %v470 = vpack.c.b16 %v420, %v418
    %v471 = vpack.c.b16 %v423, %v421
    %v472 = vpack.c.b16 %v424, %v422
    %v473 = vpack.c.b16 %v427, %v425
    %v474 = vpack.c.b16 %v428, %v426
    %v475 = vpack.c.b16 %v431, %v429
    %v476 = vpack.c.b16 %v432, %v430
    %v477 = vpack.c.b16 %v435, %v433
    %v478 = vpack.c.b16 %v436, %v434
    %v479 = vpack.c.b16 %v439, %v437
    %v480 = vpack.c.b16 %v440, %v438
    %v481 = vpack.c.b16 %v443, %v441
    %v482 = vpack.c.b16 %v444, %v442
    %v483 = vpack.c.b16 %v447, %v445
    %v484 = vpack.c.b16 %v448, %v446
    %v485 = vpack.c.b16 %v451, %v449
    %v486 = vpack.c.b16 %v452, %v450
    %v487 = vpack.c.b16 %v455, %v453
    %v488 = vpack.c.b16 %v456, %v454
    %521 = vmatpush.bf16.msra.mxu0 %v299
    %522 = vmatpush.bf16.msra.mxu0 %v298
    %523 = vmatpush.bf16.msra.mxu0 %v297
    %524 = vmatpush.bf16.msra.mxu0 %v296
    %525 = vmatpush.bf16.msra.mxu0 %v295
    %526 = vmatpush.bf16.msra.mxu0 %v294
    %527 = vmatpush.bf16.msra.mxu0 %v293
    %528 = vmatpush.bf16.msra.mxu0 %v292
    %529 = vmatmul.bf16.gmra.mxu0 %v457
    %v530 = vpop.f32.mrf.mxu0
    %v531 = vadd.f32 %v359, %v530
    %v532 = vpop.f32.mrf.mxu0
    %v533 = vadd.f32 %v359, %v532
    %534 = vmatmul.bf16.gmra.mxu0 %v459
    %v535 = vpop.f32.mrf.mxu0
    %v536 = vadd.f32 %v359, %v535
    %v537 = vpop.f32.mrf.mxu0
    %v538 = vadd.f32 %v359, %v537
    %539 = vmatmul.bf16.gmra.mxu0 %v461
    %v540 = vpop.f32.mrf.mxu0
    %v541 = vadd.f32 %v359, %v540
    %v542 = vpop.f32.mrf.mxu0
    %v543 = vadd.f32 %v359, %v542
    %544 = vmatmul.bf16.gmra.mxu0 %v463
    %v545 = vpop.f32.mrf.mxu0
    %v546 = vadd.f32 %v359, %v545
    %v547 = vpop.f32.mrf.mxu0
    %v548 = vadd.f32 %v359, %v547
    %549 = vmatmul.bf16.gmra.mxu0 %v465
    %v550 = vpop.f32.mrf.mxu0
    %v551 = vadd.f32 %v359, %v550
    %v552 = vpop.f32.mrf.mxu0
    %v553 = vadd.f32 %v359, %v552
    %554 = vmatmul.bf16.gmra.mxu0 %v467
    %v555 = vpop.f32.mrf.mxu0
    %v556 = vadd.f32 %v359, %v555
    %v557 = vpop.f32.mrf.mxu0
    %v558 = vadd.f32 %v359, %v557
    %559 = vmatmul.bf16.gmra.mxu0 %v469
    %v560 = vpop.f32.mrf.mxu0
    %v561 = vadd.f32 %v359, %v560
    %v562 = vpop.f32.mrf.mxu0
    %v563 = vadd.f32 %v359, %v562
    %564 = vmatmul.bf16.gmra.mxu0 %v471
    %v565 = vpop.f32.mrf.mxu0
    %v566 = vadd.f32 %v359, %v565
    %v567 = vpop.f32.mrf.mxu0
    %v568 = vadd.f32 %v359, %v567
    %569 = vmatmul.bf16.gmra.mxu0 %v473
    %v570 = vpop.f32.mrf.mxu0
    %v571 = vadd.f32 %v359, %v570
    %v572 = vpop.f32.mrf.mxu0
    %v573 = vadd.f32 %v359, %v572
    %574 = vmatmul.bf16.gmra.mxu0 %v475
    %v575 = vpop.f32.mrf.mxu0
    %v576 = vadd.f32 %v359, %v575
    %v577 = vpop.f32.mrf.mxu0
    %v578 = vadd.f32 %v359, %v577
    %579 = vmatmul.bf16.gmra.mxu0 %v477
    %v580 = vpop.f32.mrf.mxu0
    %v581 = vadd.f32 %v359, %v580
    %v582 = vpop.f32.mrf.mxu0
    %v583 = vadd.f32 %v359, %v582
    %584 = vmatmul.bf16.gmra.mxu0 %v479
    %v585 = vpop.f32.mrf.mxu0
    %v586 = vadd.f32 %v359, %v585
    %v587 = vpop.f32.mrf.mxu0
    %v588 = vadd.f32 %v359, %v587
    %589 = vmatmul.bf16.gmra.mxu0 %v481
    %v590 = vpop.f32.mrf.mxu0
    %v591 = vadd.f32 %v359, %v590
    %v592 = vpop.f32.mrf.mxu0
    %v593 = vadd.f32 %v359, %v592
    %594 = vmatmul.bf16.gmra.mxu0 %v483
    %v595 = vpop.f32.mrf.mxu0
    %v596 = vadd.f32 %v359, %v595
    %v597 = vpop.f32.mrf.mxu0
    %v598 = vadd.f32 %v359, %v597
    %599 = vmatmul.bf16.gmra.mxu0 %v485
    %v600 = vpop.f32.mrf.mxu0
    %v601 = vadd.f32 %v359, %v600
    %v602 = vpop.f32.mrf.mxu0
    %v603 = vadd.f32 %v359, %v602
    %604 = vmatmul.bf16.gmra.mxu0 %v487
    %v605 = vpop.f32.mrf.mxu0
    %v606 = vadd.f32 %v359, %v605
    %v607 = vpop.f32.mrf.mxu0
    %v608 = vadd.f32 %v359, %v607
    %609 = vdwg.mxu0
    %610 = vmatpush.bf16.msra.mxu0 %v307
    %611 = vmatpush.bf16.msra.mxu0 %v306
    %612 = vmatpush.bf16.msra.mxu0 %v305
    %613 = vmatpush.bf16.msra.mxu0 %v304
    %614 = vmatpush.bf16.msra.mxu0 %v303
    %615 = vmatpush.bf16.msra.mxu0 %v302
    %616 = vmatpush.bf16.msra.mxu0 %v301
    %617 = vmatpush.bf16.msra.mxu0 %v300
    %618 = vmatmul.bf16.gmra.mxu0 %v458
    %v619 = vpop.f32.mrf.mxu0
    %v620 = vadd.f32 %v531, %v619
    %v621 = vpop.f32.mrf.mxu0
    %v622 = vadd.f32 %v533, %v621
    %623 = vmatmul.bf16.gmra.mxu0 %v460
    %v624 = vpop.f32.mrf.mxu0
    %v625 = vadd.f32 %v536, %v624
    %v626 = vpop.f32.mrf.mxu0
    %v627 = vadd.f32 %v538, %v626
    %628 = vmatmul.bf16.gmra.mxu0 %v462
    %v629 = vpop.f32.mrf.mxu0
    %v630 = vadd.f32 %v541, %v629
    %v631 = vpop.f32.mrf.mxu0
    %v632 = vadd.f32 %v543, %v631
    %633 = vmatmul.bf16.gmra.mxu0 %v464
    %v634 = vpop.f32.mrf.mxu0
    %v635 = vadd.f32 %v546, %v634
    %v636 = vpop.f32.mrf.mxu0
    %v637 = vadd.f32 %v548, %v636
    %638 = vmatmul.bf16.gmra.mxu0 %v466
    %v639 = vpop.f32.mrf.mxu0
    %v640 = vadd.f32 %v551, %v639
    %v641 = vpop.f32.mrf.mxu0
    %v642 = vadd.f32 %v553, %v641
    %643 = vmatmul.bf16.gmra.mxu0 %v468
    %v644 = vpop.f32.mrf.mxu0
    %v645 = vadd.f32 %v556, %v644
    %v646 = vpop.f32.mrf.mxu0
    %v647 = vadd.f32 %v558, %v646
    %648 = vmatmul.bf16.gmra.mxu0 %v470
    %v649 = vpop.f32.mrf.mxu0
    %v650 = vadd.f32 %v561, %v649
    %v651 = vpop.f32.mrf.mxu0
    %v652 = vadd.f32 %v563, %v651
    %653 = vmatmul.bf16.gmra.mxu0 %v472
    %v654 = vpop.f32.mrf.mxu0
    %v655 = vadd.f32 %v566, %v654
    %v656 = vpop.f32.mrf.mxu0
    %v657 = vadd.f32 %v568, %v656
    %658 = vmatmul.bf16.gmra.mxu0 %v474
    %v659 = vpop.f32.mrf.mxu0
    %v660 = vadd.f32 %v571, %v659
    %v661 = vpop.f32.mrf.mxu0
    %v662 = vadd.f32 %v573, %v661
    %663 = vmatmul.bf16.gmra.mxu0 %v476
    %v664 = vpop.f32.mrf.mxu0
    %v665 = vadd.f32 %v576, %v664
    %v666 = vpop.f32.mrf.mxu0
    %v667 = vadd.f32 %v578, %v666
    %668 = vmatmul.bf16.gmra.mxu0 %v478
    %v669 = vpop.f32.mrf.mxu0
    %v670 = vadd.f32 %v581, %v669
    %v671 = vpop.f32.mrf.mxu0
    %v672 = vadd.f32 %v583, %v671
    %673 = vmatmul.bf16.gmra.mxu0 %v480
    %v674 = vpop.f32.mrf.mxu0
    %v675 = vadd.f32 %v586, %v674
    %v676 = vpop.f32.mrf.mxu0
    %v677 = vadd.f32 %v588, %v676
    %678 = vmatmul.bf16.gmra.mxu0 %v482
    %v679 = vpop.f32.mrf.mxu0
    %v680 = vadd.f32 %v591, %v679
    %v681 = vpop.f32.mrf.mxu0
    %v682 = vadd.f32 %v593, %v681
    %683 = vmatmul.bf16.gmra.mxu0 %v484
    %v684 = vpop.f32.mrf.mxu0
    %v685 = vadd.f32 %v596, %v684
    %v686 = vpop.f32.mrf.mxu0
    %v687 = vadd.f32 %v598, %v686
    %688 = vmatmul.bf16.gmra.mxu0 %v486
    %v689 = vpop.f32.mrf.mxu0
    %v690 = vadd.f32 %v601, %v689
    %v691 = vpop.f32.mrf.mxu0
    %v692 = vadd.f32 %v603, %v691
    %693 = vmatmul.bf16.gmra.mxu0 %v488
    %v694 = vpop.f32.mrf.mxu0
    %v695 = vadd.f32 %v606, %v694
    %v696 = vpop.f32.mrf.mxu0
    %v697 = vadd.f32 %v608, %v696
    %698 = vdwg.mxu0
    %v699 = vmax.f32 %v620, 0.0
    %v700 = vmax.f32 %v622, 0.0
    %v701 = vmax.f32 %v625, 0.0
    %v702 = vmax.f32 %v627, 0.0
    %v703 = vmax.f32 %v630, 0.0
    %v704 = vmax.f32 %v632, 0.0
    %v705 = vmax.f32 %v635, 0.0
    %v706 = vmax.f32 %v637, 0.0
    %v707 = vmax.f32 %v640, 0.0
    %v708 = vmax.f32 %v642, 0.0
    %v709 = vmax.f32 %v645, 0.0
    %v710 = vmax.f32 %v647, 0.0
    %v711 = vmax.f32 %v650, 0.0
    %v712 = vmax.f32 %v652, 0.0
    %v713 = vmax.f32 %v655, 0.0
    %v714 = vmax.f32 %v657, 0.0
    %v715 = vmax.f32 %v660, 0.0
    %v716 = vmax.f32 %v662, 0.0
    %v717 = vmax.f32 %v665, 0.0
    %v718 = vmax.f32 %v667, 0.0
    %v719 = vmax.f32 %v670, 0.0
    %v720 = vmax.f32 %v672, 0.0
    %v721 = vmax.f32 %v675, 0.0
    %v722 = vmax.f32 %v677, 0.0
    %v723 = vmax.f32 %v680, 0.0
    %v724 = vmax.f32 %v682, 0.0
    %v725 = vmax.f32 %v685, 0.0
    %v726 = vmax.f32 %v687, 0.0
    %v727 = vmax.f32 %v690, 0.0
    %v728 = vmax.f32 %v692, 0.0
    %v729 = vmax.f32 %v695, 0.0
    %v730 = vmax.f32 %v697, 0.0
    %731 = vmatpush.msra.mxu0 %v324
    %732 = vmatpush.msra.mxu0 %v323
    %733 = vmatpush.msra.mxu0 %v322
    %734 = vmatpush.msra.mxu0 %v321
    %735 = vmatpush.msra.mxu0 %v320
    %736 = vmatpush.msra.mxu0 %v319
    %737 = vmatpush.msra.mxu0 %v318
    %738 = vmatpush.msra.mxu0 %v317
    %739 = vmatpush.msra.mxu0 %v316
    %740 = vmatpush.msra.mxu0 %v315
    %741 = vmatpush.msra.mxu0 %v314
    %742 = vmatpush.msra.mxu0 %v313
    %743 = vmatpush.msra.mxu0 %v312
    %744 = vmatpush.msra.mxu0 %v311
    %745 = vmatpush.msra.mxu0 %v310
    %746 = vmatpush.msra.mxu0 %v309
    %747 = vmatmul.f32.gmra.mxu0 %v699
    %v748 = vpop.f32.mrf.mxu0
    %v749 = vadd.f32 0.0, %v748
    %750 = vmatmul.f32.gmra.mxu0 %v700
    %v751 = vpop.f32.mrf.mxu0
    %v752 = vadd.f32 0.0, %v751
    %753 = vmatmul.f32.gmra.mxu0 %v701
    %v754 = vpop.f32.mrf.mxu0
    %v755 = vadd.f32 0.0, %v754
    %756 = vmatmul.f32.gmra.mxu0 %v702
    %v757 = vpop.f32.mrf.mxu0
    %v758 = vadd.f32 0.0, %v757
    %759 = vmatmul.f32.gmra.mxu0 %v703
    %v760 = vpop.f32.mrf.mxu0
    %v761 = vadd.f32 0.0, %v760
    %762 = vmatmul.f32.gmra.mxu0 %v704
    %v763 = vpop.f32.mrf.mxu0
    %v764 = vadd.f32 0.0, %v763
    %765 = vmatmul.f32.gmra.mxu0 %v705
    %v766 = vpop.f32.mrf.mxu0
    %v767 = vadd.f32 0.0, %v766
    %768 = vmatmul.f32.gmra.mxu0 %v706
    %v769 = vpop.f32.mrf.mxu0
    %v770 = vadd.f32 0.0, %v769
    %771 = vmatmul.f32.gmra.mxu0 %v707
    %v772 = vpop.f32.mrf.mxu0
    %v773 = vadd.f32 0.0, %v772
    %774 = vmatmul.f32.gmra.mxu0 %v708
    %v775 = vpop.f32.mrf.mxu0
    %v776 = vadd.f32 0.0, %v775
    %777 = vmatmul.f32.gmra.mxu0 %v709
    %v778 = vpop.f32.mrf.mxu0
    %v779 = vadd.f32 0.0, %v778
    %780 = vmatmul.f32.gmra.mxu0 %v710
    %v781 = vpop.f32.mrf.mxu0
    %v782 = vadd.f32 0.0, %v781
    %783 = vmatmul.f32.gmra.mxu0 %v711
    %v784 = vpop.f32.mrf.mxu0
    %v785 = vadd.f32 0.0, %v784
    %786 = vmatmul.f32.gmra.mxu0 %v712
    %v787 = vpop.f32.mrf.mxu0
    %v788 = vadd.f32 0.0, %v787
    %789 = vmatmul.f32.gmra.mxu0 %v713
    %v790 = vpop.f32.mrf.mxu0
    %v791 = vadd.f32 0.0, %v790
    %792 = vmatmul.f32.gmra.mxu0 %v714
    %v793 = vpop.f32.mrf.mxu0
    %v794 = vadd.f32 0.0, %v793
    %795 = vmatmul.f32.gmra.mxu0 %v715
    %v796 = vpop.f32.mrf.mxu0
    %v797 = vadd.f32 0.0, %v796
    %798 = vmatmul.f32.gmra.mxu0 %v716
    %v799 = vpop.f32.mrf.mxu0
    %v800 = vadd.f32 0.0, %v799
    %801 = vmatmul.f32.gmra.mxu0 %v717
    %v802 = vpop.f32.mrf.mxu0
    %v803 = vadd.f32 0.0, %v802
    %804 = vmatmul.f32.gmra.mxu0 %v718
    %v805 = vpop.f32.mrf.mxu0
    %v806 = vadd.f32 0.0, %v805
    %807 = vmatmul.f32.gmra.mxu0 %v719
    %v808 = vpop.f32.mrf.mxu0
    %v809 = vadd.f32 0.0, %v808
    %810 = vmatmul.f32.gmra.mxu0 %v720
    %v811 = vpop.f32.mrf.mxu0
    %v812 = vadd.f32 0.0, %v811
    %813 = vmatmul.f32.gmra.mxu0 %v721
    %v814 = vpop.f32.mrf.mxu0
    %v815 = vadd.f32 0.0, %v814
    %816 = vmatmul.f32.gmra.mxu0 %v722
    %v817 = vpop.f32.mrf.mxu0
    %v818 = vadd.f32 0.0, %v817
    %819 = vmatmul.f32.gmra.mxu0 %v723
    %v820 = vpop.f32.mrf.mxu0
    %v821 = vadd.f32 0.0, %v820
    %822 = vmatmul.f32.gmra.mxu0 %v724
    %v823 = vpop.f32.mrf.mxu0
    %v824 = vadd.f32 0.0, %v823
    %825 = vmatmul.f32.gmra.mxu0 %v725
    %v826 = vpop.f32.mrf.mxu0
    %v827 = vadd.f32 0.0, %v826
    %828 = vmatmul.f32.gmra.mxu0 %v726
    %v829 = vpop.f32.mrf.mxu0
    %v830 = vadd.f32 0.0, %v829
    %831 = vmatmul.f32.gmra.mxu0 %v727
    %v832 = vpop.f32.mrf.mxu0
    %v833 = vadd.f32 0.0, %v832
    %834 = vmatmul.f32.gmra.mxu0 %v728
    %v835 = vpop.f32.mrf.mxu0
    %v836 = vadd.f32 0.0, %v835
    %837 = vmatmul.f32.gmra.mxu0 %v729
    %v838 = vpop.f32.mrf.mxu0
    %v839 = vadd.f32 0.0, %v838
    %840 = vmatmul.f32.gmra.mxu0 %v730
    %v841 = vpop.f32.mrf.mxu0
    %v842 = vadd.f32 0.0, %v841
    %843 = vdwg.mxu0
    %v844 = vpack.c.bf16 %v752, %v749
    %v845 = vpack.c.bf16 %v758, %v755
    %v846 = vpack.c.bf16 %v764, %v761
    %v847 = vpack.c.bf16 %v770, %v767
    %v848 = vpack.c.bf16 %v776, %v773
    %v849 = vpack.c.bf16 %v782, %v779
    %v850 = vpack.c.bf16 %v788, %v785
    %v851 = vpack.c.bf16 %v794, %v791
    %v852 = vpack.c.bf16 %v800, %v797
    %v853 = vpack.c.bf16 %v806, %v803
    %v854 = vpack.c.bf16 %v812, %v809
    %v855 = vpack.c.bf16 %v818, %v815
    %v856 = vpack.c.bf16 %v824, %v821
    %v857 = vpack.c.bf16 %v830, %v827
    %v858 = vpack.c.bf16 %v836, %v833
    %v859 = vpack.c.bf16 %v842, %v839
    %v861 = vperm.slane %v325, 0
    %863 = vmatpush.bf16.msra.mxu0 %v851
    %864 = vmatpush.bf16.msra.mxu0 %v850
    %865 = vmatpush.bf16.msra.mxu0 %v849
    %866 = vmatpush.bf16.msra.mxu0 %v848
    %867 = vmatpush.bf16.msra.mxu0 %v847
    %868 = vmatpush.bf16.msra.mxu0 %v846
    %869 = vmatpush.bf16.msra.mxu0 %v845
    %870 = vmatpush.bf16.msra.mxu0 %v844
    %871 = vmatmul.bf16.gmra.mxu0 %v457
    %v872 = vpop.f32.mrf.mxu0
    %v873 = vadd.f32 %v861, %v872
    %v874 = vpop.f32.mrf.mxu0
    %v875 = vadd.f32 %v861, %v874
    %876 = vmatmul.bf16.gmra.mxu0 %v459
    %v877 = vpop.f32.mrf.mxu0
    %v878 = vadd.f32 %v861, %v877
    %v879 = vpop.f32.mrf.mxu0
    %v880 = vadd.f32 %v861, %v879
    %881 = vmatmul.bf16.gmra.mxu0 %v461
    %v882 = vpop.f32.mrf.mxu0
    %v883 = vadd.f32 %v861, %v882
    %v884 = vpop.f32.mrf.mxu0
    %v885 = vadd.f32 %v861, %v884
    %886 = vmatmul.bf16.gmra.mxu0 %v463
    %v887 = vpop.f32.mrf.mxu0
    %v888 = vadd.f32 %v861, %v887
    %v889 = vpop.f32.mrf.mxu0
    %v890 = vadd.f32 %v861, %v889
    %891 = vmatmul.bf16.gmra.mxu0 %v465
    %v892 = vpop.f32.mrf.mxu0
    %v893 = vadd.f32 %v861, %v892
    %v894 = vpop.f32.mrf.mxu0
    %v895 = vadd.f32 %v861, %v894
    %896 = vmatmul.bf16.gmra.mxu0 %v467
    %v897 = vpop.f32.mrf.mxu0
    %v898 = vadd.f32 %v861, %v897
    %v899 = vpop.f32.mrf.mxu0
    %v900 = vadd.f32 %v861, %v899
    %901 = vmatmul.bf16.gmra.mxu0 %v469
    %v902 = vpop.f32.mrf.mxu0
    %v903 = vadd.f32 %v861, %v902
    %v904 = vpop.f32.mrf.mxu0
    %v905 = vadd.f32 %v861, %v904
    %906 = vmatmul.bf16.gmra.mxu0 %v471
    %v907 = vpop.f32.mrf.mxu0
    %v908 = vadd.f32 %v861, %v907
    %v909 = vpop.f32.mrf.mxu0
    %v910 = vadd.f32 %v861, %v909
    %911 = vmatmul.bf16.gmra.mxu0 %v473
    %v912 = vpop.f32.mrf.mxu0
    %v913 = vadd.f32 %v861, %v912
    %v914 = vpop.f32.mrf.mxu0
    %v915 = vadd.f32 %v861, %v914
    %916 = vmatmul.bf16.gmra.mxu0 %v475
    %v917 = vpop.f32.mrf.mxu0
    %v918 = vadd.f32 %v861, %v917
    %v919 = vpop.f32.mrf.mxu0
    %v920 = vadd.f32 %v861, %v919
    %921 = vmatmul.bf16.gmra.mxu0 %v477
    %v922 = vpop.f32.mrf.mxu0
    %v923 = vadd.f32 %v861, %v922
    %v924 = vpop.f32.mrf.mxu0
    %v925 = vadd.f32 %v861, %v924
    %926 = vmatmul.bf16.gmra.mxu0 %v479
    %v927 = vpop.f32.mrf.mxu0
    %v928 = vadd.f32 %v861, %v927
    %v929 = vpop.f32.mrf.mxu0
    %v930 = vadd.f32 %v861, %v929
    %931 = vmatmul.bf16.gmra.mxu0 %v481
    %v932 = vpop.f32.mrf.mxu0
    %v933 = vadd.f32 %v861, %v932
    %v934 = vpop.f32.mrf.mxu0
    %v935 = vadd.f32 %v861, %v934
    %936 = vmatmul.bf16.gmra.mxu0 %v483
    %v937 = vpop.f32.mrf.mxu0
    %v938 = vadd.f32 %v861, %v937
    %v939 = vpop.f32.mrf.mxu0
    %v940 = vadd.f32 %v861, %v939
    %941 = vmatmul.bf16.gmra.mxu0 %v485
    %v942 = vpop.f32.mrf.mxu0
    %v943 = vadd.f32 %v861, %v942
    %v944 = vpop.f32.mrf.mxu0
    %v945 = vadd.f32 %v861, %v944
    %946 = vmatmul.bf16.gmra.mxu0 %v487
    %v947 = vpop.f32.mrf.mxu0
    %v948 = vadd.f32 %v861, %v947
    %v949 = vpop.f32.mrf.mxu0
    %v950 = vadd.f32 %v861, %v949
    %951 = vdwg.mxu0
    %952 = vmatpush.bf16.msra.mxu0 %v859
    %953 = vmatpush.bf16.msra.mxu0 %v858
    %954 = vmatpush.bf16.msra.mxu0 %v857
    %955 = vmatpush.bf16.msra.mxu0 %v856
    %956 = vmatpush.bf16.msra.mxu0 %v855
    %957 = vmatpush.bf16.msra.mxu0 %v854
    %958 = vmatpush.bf16.msra.mxu0 %v853
    %959 = vmatpush.bf16.msra.mxu0 %v852
    %960 = vmatmul.bf16.gmra.mxu0 %v458
    %v961 = vpop.f32.mrf.mxu0
    %v962 = vadd.f32 %v873, %v961
    %v963 = vpop.f32.mrf.mxu0
    %v964 = vadd.f32 %v875, %v963
    %965 = vmatmul.bf16.gmra.mxu0 %v460
    %v966 = vpop.f32.mrf.mxu0
    %v967 = vadd.f32 %v878, %v966
    %v968 = vpop.f32.mrf.mxu0
    %v969 = vadd.f32 %v880, %v968
    %970 = vmatmul.bf16.gmra.mxu0 %v462
    %v971 = vpop.f32.mrf.mxu0
    %v972 = vadd.f32 %v883, %v971
    %v973 = vpop.f32.mrf.mxu0
    %v974 = vadd.f32 %v885, %v973
    %975 = vmatmul.bf16.gmra.mxu0 %v464
    %v976 = vpop.f32.mrf.mxu0
    %v977 = vadd.f32 %v888, %v976
    %v978 = vpop.f32.mrf.mxu0
    %v979 = vadd.f32 %v890, %v978
    %980 = vmatmul.bf16.gmra.mxu0 %v466
    %v981 = vpop.f32.mrf.mxu0
    %v982 = vadd.f32 %v893, %v981
    %v983 = vpop.f32.mrf.mxu0
    %v984 = vadd.f32 %v895, %v983
    %985 = vmatmul.bf16.gmra.mxu0 %v468
    %v986 = vpop.f32.mrf.mxu0
    %v987 = vadd.f32 %v898, %v986
    %v988 = vpop.f32.mrf.mxu0
    %v989 = vadd.f32 %v900, %v988
    %990 = vmatmul.bf16.gmra.mxu0 %v470
    %v991 = vpop.f32.mrf.mxu0
    %v992 = vadd.f32 %v903, %v991
    %v993 = vpop.f32.mrf.mxu0
    %v994 = vadd.f32 %v905, %v993
    %995 = vmatmul.bf16.gmra.mxu0 %v472
    %v996 = vpop.f32.mrf.mxu0
    %v997 = vadd.f32 %v908, %v996
    %v998 = vpop.f32.mrf.mxu0
    %v999 = vadd.f32 %v910, %v998
    %1000 = vmatmul.bf16.gmra.mxu0 %v474
    %v1001 = vpop.f32.mrf.mxu0
    %v1002 = vadd.f32 %v913, %v1001
    %v1003 = vpop.f32.mrf.mxu0
    %v1004 = vadd.f32 %v915, %v1003
    %1005 = vmatmul.bf16.gmra.mxu0 %v476
    %v1006 = vpop.f32.mrf.mxu0
    %v1007 = vadd.f32 %v918, %v1006
    %v1008 = vpop.f32.mrf.mxu0
    %v1009 = vadd.f32 %v920, %v1008
    %1010 = vmatmul.bf16.gmra.mxu0 %v478
    %v1011 = vpop.f32.mrf.mxu0
    %v1012 = vadd.f32 %v923, %v1011
    %v1013 = vpop.f32.mrf.mxu0
    %v1014 = vadd.f32 %v925, %v1013
    %1015 = vmatmul.bf16.gmra.mxu0 %v480
    %v1016 = vpop.f32.mrf.mxu0
    %v1017 = vadd.f32 %v928, %v1016
    %v1018 = vpop.f32.mrf.mxu0
    %v1019 = vadd.f32 %v930, %v1018
    %1020 = vmatmul.bf16.gmra.mxu0 %v482
    %v1021 = vpop.f32.mrf.mxu0
    %v1022 = vadd.f32 %v933, %v1021
    %v1023 = vpop.f32.mrf.mxu0
    %v1024 = vadd.f32 %v935, %v1023
    %1025 = vmatmul.bf16.gmra.mxu0 %v484
    %v1026 = vpop.f32.mrf.mxu0
    %v1027 = vadd.f32 %v938, %v1026
    %v1028 = vpop.f32.mrf.mxu0
    %v1029 = vadd.f32 %v940, %v1028
    %1030 = vmatmul.bf16.gmra.mxu0 %v486
    %v1031 = vpop.f32.mrf.mxu0
    %v1032 = vadd.f32 %v943, %v1031
    %v1033 = vpop.f32.mrf.mxu0
    %v1034 = vadd.f32 %v945, %v1033
    %1035 = vmatmul.bf16.gmra.mxu0 %v488
    %v1036 = vpop.f32.mrf.mxu0
    %v1037 = vadd.f32 %v948, %v1036
    %v1038 = vpop.f32.mrf.mxu0
    %v1039 = vadd.f32 %v950, %v1038
    %1040 = vdwg.mxu0
    %s1041 = scalar_lea.vmem [#allocation2], 256
    %v1042 = vld [vmem:[%s1041] sm:$0xff]
    %v1043 = vld [vmem:[%s1041 + $0x8] sm:$0xff]
    %v1044 = vld [vmem:[%s1041 + $0x10] sm:$0xff]
    %v1045 = vld [vmem:[%s1041 + $0x18] sm:$0xff]
    %v1046 = vld [vmem:[%s1041 + $0x20] sm:$0xff]
    %v1047 = vld [vmem:[%s1041 + $0x28] sm:$0xff]
    %v1048 = vld [vmem:[%s1041 + $0x30] sm:$0xff]
    %v1049 = vld [vmem:[%s1041 + $0x38] sm:$0xff]
    %v1050 = vld [vmem:[%s1041 + $0x40] sm:$0xff]
    %v1051 = vld [vmem:[%s1041 + $0x48] sm:$0xff]
    %v1052 = vld [vmem:[%s1041 + $0x50] sm:$0xff]
    %v1053 = vld [vmem:[%s1041 + $0x58] sm:$0xff]
    %v1054 = vld [vmem:[%s1041 + $0x60] sm:$0xff]
    %v1055 = vld [vmem:[%s1041 + $0x68] sm:$0xff]
    %v1056 = vld [vmem:[%s1041 + $0x70] sm:$0xff]
    %v1057 = vld [vmem:[%s1041 + $0x78] sm:$0xff]
    %v1058 = vld [vmem:[%s1041 + $0x80] sm:$0xff]
    %v1059 = vld [vmem:[%s1041 + $0x88] sm:$0xff]
    %v1060 = vld [vmem:[%s1041 + $0x90] sm:$0xff]
    %v1061 = vld [vmem:[%s1041 + $0x98] sm:$0xff]
    %v1062 = vld [vmem:[%s1041 + $0xa0] sm:$0xff]
    %v1063 = vld [vmem:[%s1041 + $0xa8] sm:$0xff]
    %v1064 = vld [vmem:[%s1041 + $0xb0] sm:$0xff]
    %v1065 = vld [vmem:[%s1041 + $0xb8] sm:$0xff]
    %v1066 = vld [vmem:[%s1041 + $0xc0] sm:$0xff]
    %v1067 = vld [vmem:[%s1041 + $0xc8] sm:$0xff]
    %v1068 = vld [vmem:[%s1041 + $0xd0] sm:$0xff]
    %v1069 = vld [vmem:[%s1041 + $0xd8] sm:$0xff]
    %v1070 = vld [vmem:[%s1041 + $0xe0] sm:$0xff]
    %v1071 = vld [vmem:[%s1041 + $0xe8] sm:$0xff]
    %v1072 = vld [vmem:[%s1041 + $0xf0] sm:$0xff]
    %v1073 = vld [vmem:[%s1041 + $0xf8] sm:$0xff]
    %v1106 = vunpack.c.l.b16 %v1042
    %v1107 = vunpack.c.h.b16 %v1042
    %v1108 = vunpack.c.l.b16 %v1043
    %v1109 = vunpack.c.h.b16 %v1043
    %v1110 = vunpack.c.l.b16 %v1044
    %v1111 = vunpack.c.h.b16 %v1044
    %v1112 = vunpack.c.l.b16 %v1045
    %v1113 = vunpack.c.h.b16 %v1045
    %v1114 = vunpack.c.l.b16 %v1046
    %v1115 = vunpack.c.h.b16 %v1046
    %v1116 = vunpack.c.l.b16 %v1047
    %v1117 = vunpack.c.h.b16 %v1047
    %v1118 = vunpack.c.l.b16 %v1048
    %v1119 = vunpack.c.h.b16 %v1048
    %v1120 = vunpack.c.l.b16 %v1049
    %v1121 = vunpack.c.h.b16 %v1049
    %v1122 = vunpack.c.l.b16 %v1050
    %v1123 = vunpack.c.h.b16 %v1050
    %v1124 = vunpack.c.l.b16 %v1051
    %v1125 = vunpack.c.h.b16 %v1051
    %v1126 = vunpack.c.l.b16 %v1052
    %v1127 = vunpack.c.h.b16 %v1052
    %v1128 = vunpack.c.l.b16 %v1053
    %v1129 = vunpack.c.h.b16 %v1053
    %v1130 = vunpack.c.l.b16 %v1054
    %v1131 = vunpack.c.h.b16 %v1054
    %v1132 = vunpack.c.l.b16 %v1055
    %v1133 = vunpack.c.h.b16 %v1055
    %v1134 = vunpack.c.l.b16 %v1056
    %v1135 = vunpack.c.h.b16 %v1056
    %v1136 = vunpack.c.l.b16 %v1057
    %v1137 = vunpack.c.h.b16 %v1057
    %v1138 = vunpack.c.l.b16 %v1058
    %v1139 = vunpack.c.h.b16 %v1058
    %v1140 = vunpack.c.l.b16 %v1059
    %v1141 = vunpack.c.h.b16 %v1059
    %v1142 = vunpack.c.l.b16 %v1060
    %v1143 = vunpack.c.h.b16 %v1060
    %v1144 = vunpack.c.l.b16 %v1061
    %v1145 = vunpack.c.h.b16 %v1061
    %v1146 = vunpack.c.l.b16 %v1062
    %v1147 = vunpack.c.h.b16 %v1062
    %v1148 = vunpack.c.l.b16 %v1063
    %v1149 = vunpack.c.h.b16 %v1063
    %v1150 = vunpack.c.l.b16 %v1064
    %v1151 = vunpack.c.h.b16 %v1064
    %v1152 = vunpack.c.l.b16 %v1065
    %v1153 = vunpack.c.h.b16 %v1065
    %v1154 = vunpack.c.l.b16 %v1066
    %v1155 = vunpack.c.h.b16 %v1066
    %v1156 = vunpack.c.l.b16 %v1067
    %v1157 = vunpack.c.h.b16 %v1067
    %v1158 = vunpack.c.l.b16 %v1068
    %v1159 = vunpack.c.h.b16 %v1068
    %v1160 = vunpack.c.l.b16 %v1069
    %v1161 = vunpack.c.h.b16 %v1069
    %v1162 = vunpack.c.l.b16 %v1070
    %v1163 = vunpack.c.h.b16 %v1070
    %v1164 = vunpack.c.l.b16 %v1071
    %v1165 = vunpack.c.h.b16 %v1071
    %v1166 = vunpack.c.l.b16 %v1072
    %v1167 = vunpack.c.h.b16 %v1072
    %v1168 = vunpack.c.l.b16 %v1073
    %v1169 = vunpack.c.h.b16 %v1073
    %v1170 = vpack.c.b16 %v1108, %v1106
    %v1171 = vpack.c.b16 %v1109, %v1107
    %v1172 = vpack.c.b16 %v1112, %v1110
    %v1173 = vpack.c.b16 %v1113, %v1111
    %v1174 = vpack.c.b16 %v1116, %v1114
    %v1175 = vpack.c.b16 %v1117, %v1115
    %v1176 = vpack.c.b16 %v1120, %v1118
    %v1177 = vpack.c.b16 %v1121, %v1119
    %v1178 = vpack.c.b16 %v1124, %v1122
    %v1179 = vpack.c.b16 %v1125, %v1123
    %v1180 = vpack.c.b16 %v1128, %v1126
    %v1181 = vpack.c.b16 %v1129, %v1127
    %v1182 = vpack.c.b16 %v1132, %v1130
    %v1183 = vpack.c.b16 %v1133, %v1131
    %v1184 = vpack.c.b16 %v1136, %v1134
    %v1185 = vpack.c.b16 %v1137, %v1135
    %v1186 = vpack.c.b16 %v1140, %v1138
    %v1187 = vpack.c.b16 %v1141, %v1139
    %v1188 = vpack.c.b16 %v1144, %v1142
    %v1189 = vpack.c.b16 %v1145, %v1143
    %v1190 = vpack.c.b16 %v1148, %v1146
    %v1191 = vpack.c.b16 %v1149, %v1147
    %v1192 = vpack.c.b16 %v1152, %v1150
    %v1193 = vpack.c.b16 %v1153, %v1151
    %v1194 = vpack.c.b16 %v1156, %v1154
    %v1195 = vpack.c.b16 %v1157, %v1155
    %v1196 = vpack.c.b16 %v1160, %v1158
    %v1197 = vpack.c.b16 %v1161, %v1159
    %v1198 = vpack.c.b16 %v1164, %v1162
    %v1199 = vpack.c.b16 %v1165, %v1163
    %v1200 = vpack.c.b16 %v1168, %v1166
    %v1201 = vpack.c.b16 %v1169, %v1167
    %1234 = vmatpush.bf16.msra.mxu0 %v299
    %1235 = vmatpush.bf16.msra.mxu0 %v298
    %1236 = vmatpush.bf16.msra.mxu0 %v297
    %1237 = vmatpush.bf16.msra.mxu0 %v296
    %1238 = vmatpush.bf16.msra.mxu0 %v295
    %1239 = vmatpush.bf16.msra.mxu0 %v294
    %1240 = vmatpush.bf16.msra.mxu0 %v293
    %1241 = vmatpush.bf16.msra.mxu0 %v292
    %1242 = vmatmul.bf16.gmra.mxu0 %v1170
    %v1243 = vpop.f32.mrf.mxu0
    %v1244 = vadd.f32 %v359, %v1243
    %v1245 = vpop.f32.mrf.mxu0
    %v1246 = vadd.f32 %v359, %v1245
    %1247 = vmatmul.bf16.gmra.mxu0 %v1172
    %v1248 = vpop.f32.mrf.mxu0
    %v1249 = vadd.f32 %v359, %v1248
    %v1250 = vpop.f32.mrf.mxu0
    %v1251 = vadd.f32 %v359, %v1250
    %1252 = vmatmul.bf16.gmra.mxu0 %v1174
    %v1253 = vpop.f32.mrf.mxu0
    %v1254 = vadd.f32 %v359, %v1253
    %v1255 = vpop.f32.mrf.mxu0
    %v1256 = vadd.f32 %v359, %v1255
    %1257 = vmatmul.bf16.gmra.mxu0 %v1176
    %v1258 = vpop.f32.mrf.mxu0
    %v1259 = vadd.f32 %v359, %v1258
    %v1260 = vpop.f32.mrf.mxu0
    %v1261 = vadd.f32 %v359, %v1260
    %1262 = vmatmul.bf16.gmra.mxu0 %v1178
    %v1263 = vpop.f32.mrf.mxu0
    %v1264 = vadd.f32 %v359, %v1263
    %v1265 = vpop.f32.mrf.mxu0
    %v1266 = vadd.f32 %v359, %v1265
    %1267 = vmatmul.bf16.gmra.mxu0 %v1180
    %v1268 = vpop.f32.mrf.mxu0
    %v1269 = vadd.f32 %v359, %v1268
    %v1270 = vpop.f32.mrf.mxu0
    %v1271 = vadd.f32 %v359, %v1270
    %1272 = vmatmul.bf16.gmra.mxu0 %v1182
    %v1273 = vpop.f32.mrf.mxu0
    %v1274 = vadd.f32 %v359, %v1273
    %v1275 = vpop.f32.mrf.mxu0
    %v1276 = vadd.f32 %v359, %v1275
    %1277 = vmatmul.bf16.gmra.mxu0 %v1184
    %v1278 = vpop.f32.mrf.mxu0
    %v1279 = vadd.f32 %v359, %v1278
    %v1280 = vpop.f32.mrf.mxu0
    %v1281 = vadd.f32 %v359, %v1280
    %1282 = vmatmul.bf16.gmra.mxu0 %v1186
    %v1283 = vpop.f32.mrf.mxu0
    %v1284 = vadd.f32 %v359, %v1283
    %v1285 = vpop.f32.mrf.mxu0
    %v1286 = vadd.f32 %v359, %v1285
    %1287 = vmatmul.bf16.gmra.mxu0 %v1188
    %v1288 = vpop.f32.mrf.mxu0
    %v1289 = vadd.f32 %v359, %v1288
    %v1290 = vpop.f32.mrf.mxu0
    %v1291 = vadd.f32 %v359, %v1290
    %1292 = vmatmul.bf16.gmra.mxu0 %v1190
    %v1293 = vpop.f32.mrf.mxu0
    %v1294 = vadd.f32 %v359, %v1293
    %v1295 = vpop.f32.mrf.mxu0
    %v1296 = vadd.f32 %v359, %v1295
    %1297 = vmatmul.bf16.gmra.mxu0 %v1192
    %v1298 = vpop.f32.mrf.mxu0
    %v1299 = vadd.f32 %v359, %v1298
    %v1300 = vpop.f32.mrf.mxu0
    %v1301 = vadd.f32 %v359, %v1300
    %1302 = vmatmul.bf16.gmra.mxu0 %v1194
    %v1303 = vpop.f32.mrf.mxu0
    %v1304 = vadd.f32 %v359, %v1303
    %v1305 = vpop.f32.mrf.mxu0
    %v1306 = vadd.f32 %v359, %v1305
    %1307 = vmatmul.bf16.gmra.mxu0 %v1196
    %v1308 = vpop.f32.mrf.mxu0
    %v1309 = vadd.f32 %v359, %v1308
    %v1310 = vpop.f32.mrf.mxu0
    %v1311 = vadd.f32 %v359, %v1310
    %1312 = vmatmul.bf16.gmra.mxu0 %v1198
    %v1313 = vpop.f32.mrf.mxu0
    %v1314 = vadd.f32 %v359, %v1313
    %v1315 = vpop.f32.mrf.mxu0
    %v1316 = vadd.f32 %v359, %v1315
    %1317 = vmatmul.bf16.gmra.mxu0 %v1200
    %v1318 = vpop.f32.mrf.mxu0
    %v1319 = vadd.f32 %v359, %v1318
    %v1320 = vpop.f32.mrf.mxu0
    %v1321 = vadd.f32 %v359, %v1320
    %1322 = vdwg.mxu0
    %1323 = vmatpush.bf16.msra.mxu0 %v307
    %1324 = vmatpush.bf16.msra.mxu0 %v306
    %1325 = vmatpush.bf16.msra.mxu0 %v305
    %1326 = vmatpush.bf16.msra.mxu0 %v304
    %1327 = vmatpush.bf16.msra.mxu0 %v303
    %1328 = vmatpush.bf16.msra.mxu0 %v302
    %1329 = vmatpush.bf16.msra.mxu0 %v301
    %1330 = vmatpush.bf16.msra.mxu0 %v300
    %1331 = vmatmul.bf16.gmra.mxu0 %v1171
    %v1332 = vpop.f32.mrf.mxu0
    %v1333 = vadd.f32 %v1244, %v1332
    %v1334 = vpop.f32.mrf.mxu0
    %v1335 = vadd.f32 %v1246, %v1334
    %1336 = vmatmul.bf16.gmra.mxu0 %v1173
    %v1337 = vpop.f32.mrf.mxu0
    %v1338 = vadd.f32 %v1249, %v1337
    %v1339 = vpop.f32.mrf.mxu0
    %v1340 = vadd.f32 %v1251, %v1339
    %1341 = vmatmul.bf16.gmra.mxu0 %v1175
    %v1342 = vpop.f32.mrf.mxu0
    %v1343 = vadd.f32 %v1254, %v1342
    %v1344 = vpop.f32.mrf.mxu0
    %v1345 = vadd.f32 %v1256, %v1344
    %1346 = vmatmul.bf16.gmra.mxu0 %v1177
    %v1347 = vpop.f32.mrf.mxu0
    %v1348 = vadd.f32 %v1259, %v1347
    %v1349 = vpop.f32.mrf.mxu0
    %v1350 = vadd.f32 %v1261, %v1349
    %1351 = vmatmul.bf16.gmra.mxu0 %v1179
    %v1352 = vpop.f32.mrf.mxu0
    %v1353 = vadd.f32 %v1264, %v1352
    %v1354 = vpop.f32.mrf.mxu0
    %v1355 = vadd.f32 %v1266, %v1354
    %1356 = vmatmul.bf16.gmra.mxu0 %v1181
    %v1357 = vpop.f32.mrf.mxu0
    %v1358 = vadd.f32 %v1269, %v1357
    %v1359 = vpop.f32.mrf.mxu0
    %v1360 = vadd.f32 %v1271, %v1359
    %1361 = vmatmul.bf16.gmra.mxu0 %v1183
    %v1362 = vpop.f32.mrf.mxu0
    %v1363 = vadd.f32 %v1274, %v1362
    %v1364 = vpop.f32.mrf.mxu0
    %v1365 = vadd.f32 %v1276, %v1364
    %1366 = vmatmul.bf16.gmra.mxu0 %v1185
    %v1367 = vpop.f32.mrf.mxu0
    %v1368 = vadd.f32 %v1279, %v1367
    %v1369 = vpop.f32.mrf.mxu0
    %v1370 = vadd.f32 %v1281, %v1369
    %1371 = vmatmul.bf16.gmra.mxu0 %v1187
    %v1372 = vpop.f32.mrf.mxu0
    %v1373 = vadd.f32 %v1284, %v1372
    %v1374 = vpop.f32.mrf.mxu0
    %v1375 = vadd.f32 %v1286, %v1374
    %1376 = vmatmul.bf16.gmra.mxu0 %v1189
    %v1377 = vpop.f32.mrf.mxu0
    %v1378 = vadd.f32 %v1289, %v1377
    %v1379 = vpop.f32.mrf.mxu0
    %v1380 = vadd.f32 %v1291, %v1379
    %1381 = vmatmul.bf16.gmra.mxu0 %v1191
    %v1382 = vpop.f32.mrf.mxu0
    %v1383 = vadd.f32 %v1294, %v1382
    %v1384 = vpop.f32.mrf.mxu0
    %v1385 = vadd.f32 %v1296, %v1384
    %1386 = vmatmul.bf16.gmra.mxu0 %v1193
    %v1387 = vpop.f32.mrf.mxu0
    %v1388 = vadd.f32 %v1299, %v1387
    %v1389 = vpop.f32.mrf.mxu0
    %v1390 = vadd.f32 %v1301, %v1389
    %1391 = vmatmul.bf16.gmra.mxu0 %v1195
    %v1392 = vpop.f32.mrf.mxu0
    %v1393 = vadd.f32 %v1304, %v1392
    %v1394 = vpop.f32.mrf.mxu0
    %v1395 = vadd.f32 %v1306, %v1394
    %1396 = vmatmul.bf16.gmra.mxu0 %v1197
    %v1397 = vpop.f32.mrf.mxu0
    %v1398 = vadd.f32 %v1309, %v1397
    %v1399 = vpop.f32.mrf.mxu0
    %v1400 = vadd.f32 %v1311, %v1399
    %1401 = vmatmul.bf16.gmra.mxu0 %v1199
    %v1402 = vpop.f32.mrf.mxu0
    %v1403 = vadd.f32 %v1314, %v1402
    %v1404 = vpop.f32.mrf.mxu0
    %v1405 = vadd.f32 %v1316, %v1404
    %1406 = vmatmul.bf16.gmra.mxu0 %v1201
    %v1407 = vpop.f32.mrf.mxu0
    %v1408 = vadd.f32 %v1319, %v1407
    %v1409 = vpop.f32.mrf.mxu0
    %v1410 = vadd.f32 %v1321, %v1409
    %1411 = vdwg.mxu0
    %v1412 = vmax.f32 %v1333, 0.0
    %v1413 = vmax.f32 %v1335, 0.0
    %v1414 = vmax.f32 %v1338, 0.0
    %v1415 = vmax.f32 %v1340, 0.0
    %v1416 = vmax.f32 %v1343, 0.0
    %v1417 = vmax.f32 %v1345, 0.0
    %v1418 = vmax.f32 %v1348, 0.0
    %v1419 = vmax.f32 %v1350, 0.0
    %v1420 = vmax.f32 %v1353, 0.0
    %v1421 = vmax.f32 %v1355, 0.0
    %v1422 = vmax.f32 %v1358, 0.0
    %v1423 = vmax.f32 %v1360, 0.0
    %v1424 = vmax.f32 %v1363, 0.0
    %v1425 = vmax.f32 %v1365, 0.0
    %v1426 = vmax.f32 %v1368, 0.0
    %v1427 = vmax.f32 %v1370, 0.0
    %v1428 = vmax.f32 %v1373, 0.0
    %v1429 = vmax.f32 %v1375, 0.0
    %v1430 = vmax.f32 %v1378, 0.0
    %v1431 = vmax.f32 %v1380, 0.0
    %v1432 = vmax.f32 %v1383, 0.0
    %v1433 = vmax.f32 %v1385, 0.0
    %v1434 = vmax.f32 %v1388, 0.0
    %v1435 = vmax.f32 %v1390, 0.0
    %v1436 = vmax.f32 %v1393, 0.0
    %v1437 = vmax.f32 %v1395, 0.0
    %v1438 = vmax.f32 %v1398, 0.0
    %v1439 = vmax.f32 %v1400, 0.0
    %v1440 = vmax.f32 %v1403, 0.0
    %v1441 = vmax.f32 %v1405, 0.0
    %v1442 = vmax.f32 %v1408, 0.0
    %v1443 = vmax.f32 %v1410, 0.0
    %1444 = vmatpush.msra.mxu0 %v324
    %1445 = vmatpush.msra.mxu0 %v323
    %1446 = vmatpush.msra.mxu0 %v322
    %1447 = vmatpush.msra.mxu0 %v321
    %1448 = vmatpush.msra.mxu0 %v320
    %1449 = vmatpush.msra.mxu0 %v319
    %1450 = vmatpush.msra.mxu0 %v318
    %1451 = vmatpush.msra.mxu0 %v317
    %1452 = vmatpush.msra.mxu0 %v316
    %1453 = vmatpush.msra.mxu0 %v315
    %1454 = vmatpush.msra.mxu0 %v314
    %1455 = vmatpush.msra.mxu0 %v313
    %1456 = vmatpush.msra.mxu0 %v312
    %1457 = vmatpush.msra.mxu0 %v311
    %1458 = vmatpush.msra.mxu0 %v310
    %1459 = vmatpush.msra.mxu0 %v309
    %1460 = vmatmul.f32.gmra.mxu0 %v1412
    %v1461 = vpop.f32.mrf.mxu0
    %v1462 = vadd.f32 0.0, %v1461
    %1463 = vmatmul.f32.gmra.mxu0 %v1413
    %v1464 = vpop.f32.mrf.mxu0
    %v1465 = vadd.f32 0.0, %v1464
    %1466 = vmatmul.f32.gmra.mxu0 %v1414
    %v1467 = vpop.f32.mrf.mxu0
    %v1468 = vadd.f32 0.0, %v1467
    %1469 = vmatmul.f32.gmra.mxu0 %v1415
    %v1470 = vpop.f32.mrf.mxu0
    %v1471 = vadd.f32 0.0, %v1470
    %1472 = vmatmul.f32.gmra.mxu0 %v1416
    %v1473 = vpop.f32.mrf.mxu0
    %v1474 = vadd.f32 0.0, %v1473
    %1475 = vmatmul.f32.gmra.mxu0 %v1417
    %v1476 = vpop.f32.mrf.mxu0
    %v1477 = vadd.f32 0.0, %v1476
    %1478 = vmatmul.f32.gmra.mxu0 %v1418
    %v1479 = vpop.f32.mrf.mxu0
    %v1480 = vadd.f32 0.0, %v1479
    %1481 = vmatmul.f32.gmra.mxu0 %v1419
    %v1482 = vpop.f32.mrf.mxu0
    %v1483 = vadd.f32 0.0, %v1482
    %1484 = vmatmul.f32.gmra.mxu0 %v1420
    %v1485 = vpop.f32.mrf.mxu0
    %v1486 = vadd.f32 0.0, %v1485
    %1487 = vmatmul.f32.gmra.mxu0 %v1421
    %v1488 = vpop.f32.mrf.mxu0
    %v1489 = vadd.f32 0.0, %v1488
    %1490 = vmatmul.f32.gmra.mxu0 %v1422
    %v1491 = vpop.f32.mrf.mxu0
    %v1492 = vadd.f32 0.0, %v1491
    %1493 = vmatmul.f32.gmra.mxu0 %v1423
    %v1494 = vpop.f32.mrf.mxu0
    %v1495 = vadd.f32 0.0, %v1494
    %1496 = vmatmul.f32.gmra.mxu0 %v1424
    %v1497 = vpop.f32.mrf.mxu0
    %v1498 = vadd.f32 0.0, %v1497
    %1499 = vmatmul.f32.gmra.mxu0 %v1425
    %v1500 = vpop.f32.mrf.mxu0
    %v1501 = vadd.f32 0.0, %v1500
    %1502 = vmatmul.f32.gmra.mxu0 %v1426
    %v1503 = vpop.f32.mrf.mxu0
    %v1504 = vadd.f32 0.0, %v1503
    %1505 = vmatmul.f32.gmra.mxu0 %v1427
    %v1506 = vpop.f32.mrf.mxu0
    %v1507 = vadd.f32 0.0, %v1506
    %1508 = vmatmul.f32.gmra.mxu0 %v1428
    %v1509 = vpop.f32.mrf.mxu0
    %v1510 = vadd.f32 0.0, %v1509
    %1511 = vmatmul.f32.gmra.mxu0 %v1429
    %v1512 = vpop.f32.mrf.mxu0
    %v1513 = vadd.f32 0.0, %v1512
    %1514 = vmatmul.f32.gmra.mxu0 %v1430
    %v1515 = vpop.f32.mrf.mxu0
    %v1516 = vadd.f32 0.0, %v1515
    %1517 = vmatmul.f32.gmra.mxu0 %v1431
    %v1518 = vpop.f32.mrf.mxu0
    %v1519 = vadd.f32 0.0, %v1518
    %1520 = vmatmul.f32.gmra.mxu0 %v1432
    %v1521 = vpop.f32.mrf.mxu0
    %v1522 = vadd.f32 0.0, %v1521
    %1523 = vmatmul.f32.gmra.mxu0 %v1433
    %v1524 = vpop.f32.mrf.mxu0
    %v1525 = vadd.f32 0.0, %v1524
    %1526 = vmatmul.f32.gmra.mxu0 %v1434
    %v1527 = vpop.f32.mrf.mxu0
    %v1528 = vadd.f32 0.0, %v1527
    %1529 = vmatmul.f32.gmra.mxu0 %v1435
    %v1530 = vpop.f32.mrf.mxu0
    %v1531 = vadd.f32 0.0, %v1530
    %1532 = vmatmul.f32.gmra.mxu0 %v1436
    %v1533 = vpop.f32.mrf.mxu0
    %v1534 = vadd.f32 0.0, %v1533
    %1535 = vmatmul.f32.gmra.mxu0 %v1437
    %v1536 = vpop.f32.mrf.mxu0
    %v1537 = vadd.f32 0.0, %v1536
    %1538 = vmatmul.f32.gmra.mxu0 %v1438
    %v1539 = vpop.f32.mrf.mxu0
    %v1540 = vadd.f32 0.0, %v1539
    %1541 = vmatmul.f32.gmra.mxu0 %v1439
    %v1542 = vpop.f32.mrf.mxu0
    %v1543 = vadd.f32 0.0, %v1542
    %1544 = vmatmul.f32.gmra.mxu0 %v1440
    %v1545 = vpop.f32.mrf.mxu0
    %v1546 = vadd.f32 0.0, %v1545
    %1547 = vmatmul.f32.gmra.mxu0 %v1441
    %v1548 = vpop.f32.mrf.mxu0
    %v1549 = vadd.f32 0.0, %v1548
    %1550 = vmatmul.f32.gmra.mxu0 %v1442
    %v1551 = vpop.f32.mrf.mxu0
    %v1552 = vadd.f32 0.0, %v1551
    %1553 = vmatmul.f32.gmra.mxu0 %v1443
    %v1554 = vpop.f32.mrf.mxu0
    %v1555 = vadd.f32 0.0, %v1554
    %1556 = vdwg.mxu0
    %v1557 = vpack.c.bf16 %v1465, %v1462
    %v1558 = vpack.c.bf16 %v1471, %v1468
    %v1559 = vpack.c.bf16 %v1477, %v1474
    %v1560 = vpack.c.bf16 %v1483, %v1480
    %v1561 = vpack.c.bf16 %v1489, %v1486
    %v1562 = vpack.c.bf16 %v1495, %v1492
    %v1563 = vpack.c.bf16 %v1501, %v1498
    %v1564 = vpack.c.bf16 %v1507, %v1504
    %v1565 = vpack.c.bf16 %v1513, %v1510
    %v1566 = vpack.c.bf16 %v1519, %v1516
    %v1567 = vpack.c.bf16 %v1525, %v1522
    %v1568 = vpack.c.bf16 %v1531, %v1528
    %v1569 = vpack.c.bf16 %v1537, %v1534
    %v1570 = vpack.c.bf16 %v1543, %v1540
    %v1571 = vpack.c.bf16 %v1549, %v1546
    %v1572 = vpack.c.bf16 %v1555, %v1552
    %1573 = vmatpush.bf16.msra.mxu0 %v1564
    %1574 = vmatpush.bf16.msra.mxu0 %v1563
    %1575 = vmatpush.bf16.msra.mxu0 %v1562
    %1576 = vmatpush.bf16.msra.mxu0 %v1561
    %1577 = vmatpush.bf16.msra.mxu0 %v1560
    %1578 = vmatpush.bf16.msra.mxu0 %v1559
    %1579 = vmatpush.bf16.msra.mxu0 %v1558
    %1580 = vmatpush.bf16.msra.mxu0 %v1557
    %1581 = vmatmul.bf16.gmra.mxu0 %v1170
    %v1582 = vpop.f32.mrf.mxu0
    %v1583 = vadd.f32 %v861, %v1582
    %v1584 = vpop.f32.mrf.mxu0
    %v1585 = vadd.f32 %v861, %v1584
    %1586 = vmatmul.bf16.gmra.mxu0 %v1172
    %v1587 = vpop.f32.mrf.mxu0
    %v1588 = vadd.f32 %v861, %v1587
    %v1589 = vpop.f32.mrf.mxu0
    %v1590 = vadd.f32 %v861, %v1589
    %1591 = vmatmul.bf16.gmra.mxu0 %v1174
    %v1592 = vpop.f32.mrf.mxu0
    %v1593 = vadd.f32 %v861, %v1592
    %v1594 = vpop.f32.mrf.mxu0
    %v1595 = vadd.f32 %v861, %v1594
    %1596 = vmatmul.bf16.gmra.mxu0 %v1176
    %v1597 = vpop.f32.mrf.mxu0
    %v1598 = vadd.f32 %v861, %v1597
    %v1599 = vpop.f32.mrf.mxu0
    %v1600 = vadd.f32 %v861, %v1599
    %1601 = vmatmul.bf16.gmra.mxu0 %v1178
    %v1602 = vpop.f32.mrf.mxu0
    %v1603 = vadd.f32 %v861, %v1602
    %v1604 = vpop.f32.mrf.mxu0
    %v1605 = vadd.f32 %v861, %v1604
    %1606 = vmatmul.bf16.gmra.mxu0 %v1180
    %v1607 = vpop.f32.mrf.mxu0
    %v1608 = vadd.f32 %v861, %v1607
    %v1609 = vpop.f32.mrf.mxu0
    %v1610 = vadd.f32 %v861, %v1609
    %1611 = vmatmul.bf16.gmra.mxu0 %v1182
    %v1612 = vpop.f32.mrf.mxu0
    %v1613 = vadd.f32 %v861, %v1612
    %v1614 = vpop.f32.mrf.mxu0
    %v1615 = vadd.f32 %v861, %v1614
    %1616 = vmatmul.bf16.gmra.mxu0 %v1184
    %v1617 = vpop.f32.mrf.mxu0
    %v1618 = vadd.f32 %v861, %v1617
    %v1619 = vpop.f32.mrf.mxu0
    %v1620 = vadd.f32 %v861, %v1619
    %1621 = vmatmul.bf16.gmra.mxu0 %v1186
    %v1622 = vpop.f32.mrf.mxu0
    %v1623 = vadd.f32 %v861, %v1622
    %v1624 = vpop.f32.mrf.mxu0
    %v1625 = vadd.f32 %v861, %v1624
    %1626 = vmatmul.bf16.gmra.mxu0 %v1188
    %v1627 = vpop.f32.mrf.mxu0
    %v1628 = vadd.f32 %v861, %v1627
    %v1629 = vpop.f32.mrf.mxu0
    %v1630 = vadd.f32 %v861, %v1629
    %1631 = vmatmul.bf16.gmra.mxu0 %v1190
    %v1632 = vpop.f32.mrf.mxu0
    %v1633 = vadd.f32 %v861, %v1632
    %v1634 = vpop.f32.mrf.mxu0
    %v1635 = vadd.f32 %v861, %v1634
    %1636 = vmatmul.bf16.gmra.mxu0 %v1192
    %v1637 = vpop.f32.mrf.mxu0
    %v1638 = vadd.f32 %v861, %v1637
    %v1639 = vpop.f32.mrf.mxu0
    %v1640 = vadd.f32 %v861, %v1639
    %1641 = vmatmul.bf16.gmra.mxu0 %v1194
    %v1642 = vpop.f32.mrf.mxu0
    %v1643 = vadd.f32 %v861, %v1642
    %v1644 = vpop.f32.mrf.mxu0
    %v1645 = vadd.f32 %v861, %v1644
    %1646 = vmatmul.bf16.gmra.mxu0 %v1196
    %v1647 = vpop.f32.mrf.mxu0
    %v1648 = vadd.f32 %v861, %v1647
    %v1649 = vpop.f32.mrf.mxu0
    %v1650 = vadd.f32 %v861, %v1649
    %1651 = vmatmul.bf16.gmra.mxu0 %v1198
    %v1652 = vpop.f32.mrf.mxu0
    %v1653 = vadd.f32 %v861, %v1652
    %v1654 = vpop.f32.mrf.mxu0
    %v1655 = vadd.f32 %v861, %v1654
    %1656 = vmatmul.bf16.gmra.mxu0 %v1200
    %v1657 = vpop.f32.mrf.mxu0
    %v1658 = vadd.f32 %v861, %v1657
    %v1659 = vpop.f32.mrf.mxu0
    %v1660 = vadd.f32 %v861, %v1659
    %1661 = vdwg.mxu0
    %1662 = vmatpush.bf16.msra.mxu0 %v1572
    %1663 = vmatpush.bf16.msra.mxu0 %v1571
    %1664 = vmatpush.bf16.msra.mxu0 %v1570
    %1665 = vmatpush.bf16.msra.mxu0 %v1569
    %1666 = vmatpush.bf16.msra.mxu0 %v1568
    %1667 = vmatpush.bf16.msra.mxu0 %v1567
    %1668 = vmatpush.bf16.msra.mxu0 %v1566
    %1669 = vmatpush.bf16.msra.mxu0 %v1565
    %1670 = vmatmul.bf16.gmra.mxu0 %v1171
    %v1671 = vpop.f32.mrf.mxu0
    %v1672 = vadd.f32 %v1583, %v1671
    %v1673 = vpop.f32.mrf.mxu0
    %v1674 = vadd.f32 %v1585, %v1673
    %1675 = vmatmul.bf16.gmra.mxu0 %v1173
    %v1676 = vpop.f32.mrf.mxu0
    %v1677 = vadd.f32 %v1588, %v1676
    %v1678 = vpop.f32.mrf.mxu0
    %v1679 = vadd.f32 %v1590, %v1678
    %1680 = vmatmul.bf16.gmra.mxu0 %v1175
    %v1681 = vpop.f32.mrf.mxu0
    %v1682 = vadd.f32 %v1593, %v1681
    %v1683 = vpop.f32.mrf.mxu0
    %v1684 = vadd.f32 %v1595, %v1683
    %1685 = vmatmul.bf16.gmra.mxu0 %v1177
    %v1686 = vpop.f32.mrf.mxu0
    %v1687 = vadd.f32 %v1598, %v1686
    %v1688 = vpop.f32.mrf.mxu0
    %v1689 = vadd.f32 %v1600, %v1688
    %1690 = vmatmul.bf16.gmra.mxu0 %v1179
    %v1691 = vpop.f32.mrf.mxu0
    %v1692 = vadd.f32 %v1603, %v1691
    %v1693 = vpop.f32.mrf.mxu0
    %v1694 = vadd.f32 %v1605, %v1693
    %1695 = vmatmul.bf16.gmra.mxu0 %v1181
    %v1696 = vpop.f32.mrf.mxu0
    %v1697 = vadd.f32 %v1608, %v1696
    %v1698 = vpop.f32.mrf.mxu0
    %v1699 = vadd.f32 %v1610, %v1698
    %1700 = vmatmul.bf16.gmra.mxu0 %v1183
    %v1701 = vpop.f32.mrf.mxu0
    %v1702 = vadd.f32 %v1613, %v1701
    %v1703 = vpop.f32.mrf.mxu0
    %v1704 = vadd.f32 %v1615, %v1703
    %1705 = vmatmul.bf16.gmra.mxu0 %v1185
    %v1706 = vpop.f32.mrf.mxu0
    %v1707 = vadd.f32 %v1618, %v1706
    %v1708 = vpop.f32.mrf.mxu0
    %v1709 = vadd.f32 %v1620, %v1708
    %1710 = vmatmul.bf16.gmra.mxu0 %v1187
    %v1711 = vpop.f32.mrf.mxu0
    %v1712 = vadd.f32 %v1623, %v1711
    %v1713 = vpop.f32.mrf.mxu0
    %v1714 = vadd.f32 %v1625, %v1713
    %1715 = vmatmul.bf16.gmra.mxu0 %v1189
    %v1716 = vpop.f32.mrf.mxu0
    %v1717 = vadd.f32 %v1628, %v1716
    %v1718 = vpop.f32.mrf.mxu0
    %v1719 = vadd.f32 %v1630, %v1718
    %1720 = vmatmul.bf16.gmra.mxu0 %v1191
    %v1721 = vpop.f32.mrf.mxu0
    %v1722 = vadd.f32 %v1633, %v1721
    %v1723 = vpop.f32.mrf.mxu0
    %v1724 = vadd.f32 %v1635, %v1723
    %1725 = vmatmul.bf16.gmra.mxu0 %v1193
    %v1726 = vpop.f32.mrf.mxu0
    %v1727 = vadd.f32 %v1638, %v1726
    %v1728 = vpop.f32.mrf.mxu0
    %v1729 = vadd.f32 %v1640, %v1728
    %1730 = vmatmul.bf16.gmra.mxu0 %v1195
    %v1731 = vpop.f32.mrf.mxu0
    %v1732 = vadd.f32 %v1643, %v1731
    %v1733 = vpop.f32.mrf.mxu0
    %v1734 = vadd.f32 %v1645, %v1733
    %1735 = vmatmul.bf16.gmra.mxu0 %v1197
    %v1736 = vpop.f32.mrf.mxu0
    %v1737 = vadd.f32 %v1648, %v1736
    %v1738 = vpop.f32.mrf.mxu0
    %v1739 = vadd.f32 %v1650, %v1738
    %1740 = vmatmul.bf16.gmra.mxu0 %v1199
    %v1741 = vpop.f32.mrf.mxu0
    %v1742 = vadd.f32 %v1653, %v1741
    %v1743 = vpop.f32.mrf.mxu0
    %v1744 = vadd.f32 %v1655, %v1743
    %1745 = vmatmul.bf16.gmra.mxu0 %v1201
    %v1746 = vpop.f32.mrf.mxu0
    %v1747 = vadd.f32 %v1658, %v1746
    %v1748 = vpop.f32.mrf.mxu0
    %v1749 = vadd.f32 %v1660, %v1748
    %1750 = vdwg.mxu0
    %v1751 = vld [vmem:[%s6] sm:$0xff]
    %v1752 = vld [vmem:[%s6 + $0x8] sm:$0xff]
    %v1753 = vld [vmem:[%s6 + $0x10] sm:$0xff]
    %v1754 = vld [vmem:[%s6 + $0x18] sm:$0xff]
    %v1755 = vld [vmem:[%s6 + $0x20] sm:$0xff]
    %v1756 = vld [vmem:[%s6 + $0x28] sm:$0xff]
    %v1757 = vld [vmem:[%s6 + $0x30] sm:$0xff]
    %v1758 = vld [vmem:[%s6 + $0x38] sm:$0xff]
    %v1759 = vld [vmem:[%s6 + $0x40] sm:$0xff]
    %v1760 = vld [vmem:[%s6 + $0x48] sm:$0xff]
    %v1761 = vld [vmem:[%s6 + $0x50] sm:$0xff]
    %v1762 = vld [vmem:[%s6 + $0x58] sm:$0xff]
    %v1763 = vld [vmem:[%s6 + $0x60] sm:$0xff]
    %v1764 = vld [vmem:[%s6 + $0x68] sm:$0xff]
    %v1765 = vld [vmem:[%s6 + $0x70] sm:$0xff]
    %v1766 = vld [vmem:[%s6 + $0x78] sm:$0xff]
    %v1767 = vld [vmem:[%s7] sm:$0xff]
    %v1768 = vld [vmem:[%s7 + $0x8] sm:$0xff]
    %v1769 = vld [vmem:[%s7 + $0x10] sm:$0xff]
    %v1770 = vld [vmem:[%s7 + $0x18] sm:$0xff]
    %v1771 = vld [vmem:[%s7 + $0x20] sm:$0xff]
    %v1772 = vld [vmem:[%s7 + $0x28] sm:$0xff]
    %v1773 = vld [vmem:[%s7 + $0x30] sm:$0xff]
    %v1774 = vld [vmem:[%s7 + $0x38] sm:$0xff]
    %v1775 = vld [vmem:[%s7 + $0x40] sm:$0xff]
    %v1776 = vld [vmem:[%s7 + $0x48] sm:$0xff]
    %v1777 = vld [vmem:[%s7 + $0x50] sm:$0xff]
    %v1778 = vld [vmem:[%s7 + $0x58] sm:$0xff]
    %v1779 = vld [vmem:[%s7 + $0x60] sm:$0xff]
    %v1780 = vld [vmem:[%s7 + $0x68] sm:$0xff]
    %v1781 = vld [vmem:[%s7 + $0x70] sm:$0xff]
    %v1782 = vld [vmem:[%s7 + $0x78] sm:$0xff]
    %1783 = vmatpush.msra.mxu0 %v1782
    %1784 = vmatpush.msra.mxu0 %v1781
    %1785 = vmatpush.msra.mxu0 %v1780
    %1786 = vmatpush.msra.mxu0 %v1779
    %1787 = vmatpush.msra.mxu0 %v1778
    %1788 = vmatpush.msra.mxu0 %v1777
    %1789 = vmatpush.msra.mxu0 %v1776
    %1790 = vmatpush.msra.mxu0 %v1775
    %1791 = vmatpush.msra.mxu0 %v1774
    %1792 = vmatpush.msra.mxu0 %v1773
    %1793 = vmatpush.msra.mxu0 %v1772
    %1794 = vmatpush.msra.mxu0 %v1771
    %1795 = vmatpush.msra.mxu0 %v1770
    %1796 = vmatpush.msra.mxu0 %v1769
    %1797 = vmatpush.msra.mxu0 %v1768
    %1798 = vmatpush.msra.mxu0 %v1767
    %1799 = vmatmul.f32.gmra.mxu0 %v1672
    %v1800 = vpop.f32.mrf.mxu0
    %v1801 = vadd.f32 0.0, %v1800
    %1802 = vmatmul.f32.gmra.mxu0 %v1674
    %v1803 = vpop.f32.mrf.mxu0
    %v1804 = vadd.f32 0.0, %v1803
    %1805 = vmatmul.f32.gmra.mxu0 %v1677
    %v1806 = vpop.f32.mrf.mxu0
    %v1807 = vadd.f32 0.0, %v1806
    %1808 = vmatmul.f32.gmra.mxu0 %v1679
    %v1809 = vpop.f32.mrf.mxu0
    %v1810 = vadd.f32 0.0, %v1809
    %1811 = vmatmul.f32.gmra.mxu0 %v1682
    %v1812 = vpop.f32.mrf.mxu0
    %v1813 = vadd.f32 0.0, %v1812
    %1814 = vmatmul.f32.gmra.mxu0 %v1684
    %v1815 = vpop.f32.mrf.mxu0
    %v1816 = vadd.f32 0.0, %v1815
    %1817 = vmatmul.f32.gmra.mxu0 %v1687
    %v1818 = vpop.f32.mrf.mxu0
    %v1819 = vadd.f32 0.0, %v1818
    %1820 = vmatmul.f32.gmra.mxu0 %v1689
    %v1821 = vpop.f32.mrf.mxu0
    %v1822 = vadd.f32 0.0, %v1821
    %1823 = vmatmul.f32.gmra.mxu0 %v1692
    %v1824 = vpop.f32.mrf.mxu0
    %v1825 = vadd.f32 0.0, %v1824
    %1826 = vmatmul.f32.gmra.mxu0 %v1694
    %v1827 = vpop.f32.mrf.mxu0
    %v1828 = vadd.f32 0.0, %v1827
    %1829 = vmatmul.f32.gmra.mxu0 %v1697
    %v1830 = vpop.f32.mrf.mxu0
    %v1831 = vadd.f32 0.0, %v1830
    %1832 = vmatmul.f32.gmra.mxu0 %v1699
    %v1833 = vpop.f32.mrf.mxu0
    %v1834 = vadd.f32 0.0, %v1833
    %1835 = vmatmul.f32.gmra.mxu0 %v1702
    %v1836 = vpop.f32.mrf.mxu0
    %v1837 = vadd.f32 0.0, %v1836
    %1838 = vmatmul.f32.gmra.mxu0 %v1704
    %v1839 = vpop.f32.mrf.mxu0
    %v1840 = vadd.f32 0.0, %v1839
    %1841 = vmatmul.f32.gmra.mxu0 %v1707
    %v1842 = vpop.f32.mrf.mxu0
    %v1843 = vadd.f32 0.0, %v1842
    %1844 = vmatmul.f32.gmra.mxu0 %v1709
    %v1845 = vpop.f32.mrf.mxu0
    %v1846 = vadd.f32 0.0, %v1845
    %1847 = vmatmul.f32.gmra.mxu0 %v1712
    %v1848 = vpop.f32.mrf.mxu0
    %v1849 = vadd.f32 0.0, %v1848
    %1850 = vmatmul.f32.gmra.mxu0 %v1714
    %v1851 = vpop.f32.mrf.mxu0
    %v1852 = vadd.f32 0.0, %v1851
    %1853 = vmatmul.f32.gmra.mxu0 %v1717
    %v1854 = vpop.f32.mrf.mxu0
    %v1855 = vadd.f32 0.0, %v1854
    %1856 = vmatmul.f32.gmra.mxu0 %v1719
    %v1857 = vpop.f32.mrf.mxu0
    %v1858 = vadd.f32 0.0, %v1857
    %1859 = vmatmul.f32.gmra.mxu0 %v1722
    %v1860 = vpop.f32.mrf.mxu0
    %v1861 = vadd.f32 0.0, %v1860
    %1862 = vmatmul.f32.gmra.mxu0 %v1724
    %v1863 = vpop.f32.mrf.mxu0
    %v1864 = vadd.f32 0.0, %v1863
    %1865 = vmatmul.f32.gmra.mxu0 %v1727
    %v1866 = vpop.f32.mrf.mxu0
    %v1867 = vadd.f32 0.0, %v1866
    %1868 = vmatmul.f32.gmra.mxu0 %v1729
    %v1869 = vpop.f32.mrf.mxu0
    %v1870 = vadd.f32 0.0, %v1869
    %1871 = vmatmul.f32.gmra.mxu0 %v1732
    %v1872 = vpop.f32.mrf.mxu0
    %v1873 = vadd.f32 0.0, %v1872
    %1874 = vmatmul.f32.gmra.mxu0 %v1734
    %v1875 = vpop.f32.mrf.mxu0
    %v1876 = vadd.f32 0.0, %v1875
    %1877 = vmatmul.f32.gmra.mxu0 %v1737
    %v1878 = vpop.f32.mrf.mxu0
    %v1879 = vadd.f32 0.0, %v1878
    %1880 = vmatmul.f32.gmra.mxu0 %v1739
    %v1881 = vpop.f32.mrf.mxu0
    %v1882 = vadd.f32 0.0, %v1881
    %1883 = vmatmul.f32.gmra.mxu0 %v1742
    %v1884 = vpop.f32.mrf.mxu0
    %v1885 = vadd.f32 0.0, %v1884
    %1886 = vmatmul.f32.gmra.mxu0 %v1744
    %v1887 = vpop.f32.mrf.mxu0
    %v1888 = vadd.f32 0.0, %v1887
    %1889 = vmatmul.f32.gmra.mxu0 %v1747
    %v1890 = vpop.f32.mrf.mxu0
    %v1891 = vadd.f32 0.0, %v1890
    %1892 = vmatmul.f32.gmra.mxu0 %v1749
    %v1893 = vpop.f32.mrf.mxu0
    %v1894 = vadd.f32 0.0, %v1893
    %1895 = vdwg.mxu0
    %1896 = vmatpush.msra.mxu0 %v1766
    %1897 = vmatpush.msra.mxu0 %v1765
    %1898 = vmatpush.msra.mxu0 %v1764
    %1899 = vmatpush.msra.mxu0 %v1763
    %1900 = vmatpush.msra.mxu0 %v1762
    %1901 = vmatpush.msra.mxu0 %v1761
    %1902 = vmatpush.msra.mxu0 %v1760
    %1903 = vmatpush.msra.mxu0 %v1759
    %1904 = vmatpush.msra.mxu0 %v1758
    %1905 = vmatpush.msra.mxu0 %v1757
    %1906 = vmatpush.msra.mxu0 %v1756
    %1907 = vmatpush.msra.mxu0 %v1755
    %1908 = vmatpush.msra.mxu0 %v1754
    %1909 = vmatpush.msra.mxu0 %v1753
    %1910 = vmatpush.msra.mxu0 %v1752
    %1911 = vmatpush.msra.mxu0 %v1751
    %1912 = vmatmul.f32.gmra.mxu0 %v962
    %v1913 = vpop.f32.mrf.mxu0
    %v1914 = vadd.f32 %v1801, %v1913
    %1915 = vmatmul.f32.gmra.mxu0 %v964
    %v1916 = vpop.f32.mrf.mxu0
    %v1917 = vadd.f32 %v1804, %v1916
    %1918 = vmatmul.f32.gmra.mxu0 %v967
    %v1919 = vpop.f32.mrf.mxu0
    %v1920 = vadd.f32 %v1807, %v1919
    %1921 = vmatmul.f32.gmra.mxu0 %v969
    %v1922 = vpop.f32.mrf.mxu0
    %v1923 = vadd.f32 %v1810, %v1922
    %1924 = vmatmul.f32.gmra.mxu0 %v972
    %v1925 = vpop.f32.mrf.mxu0
    %v1926 = vadd.f32 %v1813, %v1925
    %1927 = vmatmul.f32.gmra.mxu0 %v974
    %v1928 = vpop.f32.mrf.mxu0
    %v1929 = vadd.f32 %v1816, %v1928
    %1930 = vmatmul.f32.gmra.mxu0 %v977
    %v1931 = vpop.f32.mrf.mxu0
    %v1932 = vadd.f32 %v1819, %v1931
    %1933 = vmatmul.f32.gmra.mxu0 %v979
    %v1934 = vpop.f32.mrf.mxu0
    %v1935 = vadd.f32 %v1822, %v1934
    %1936 = vmatmul.f32.gmra.mxu0 %v982
    %v1937 = vpop.f32.mrf.mxu0
    %v1938 = vadd.f32 %v1825, %v1937
    %1939 = vmatmul.f32.gmra.mxu0 %v984
    %v1940 = vpop.f32.mrf.mxu0
    %v1941 = vadd.f32 %v1828, %v1940
    %1942 = vmatmul.f32.gmra.mxu0 %v987
    %v1943 = vpop.f32.mrf.mxu0
    %v1944 = vadd.f32 %v1831, %v1943
    %1945 = vmatmul.f32.gmra.mxu0 %v989
    %v1946 = vpop.f32.mrf.mxu0
    %v1947 = vadd.f32 %v1834, %v1946
    %1948 = vmatmul.f32.gmra.mxu0 %v992
    %v1949 = vpop.f32.mrf.mxu0
    %v1950 = vadd.f32 %v1837, %v1949
    %1951 = vmatmul.f32.gmra.mxu0 %v994
    %v1952 = vpop.f32.mrf.mxu0
    %v1953 = vadd.f32 %v1840, %v1952
    %1954 = vmatmul.f32.gmra.mxu0 %v997
    %v1955 = vpop.f32.mrf.mxu0
    %v1956 = vadd.f32 %v1843, %v1955
    %1957 = vmatmul.f32.gmra.mxu0 %v999
    %v1958 = vpop.f32.mrf.mxu0
    %v1959 = vadd.f32 %v1846, %v1958
    %1960 = vmatmul.f32.gmra.mxu0 %v1002
    %v1961 = vpop.f32.mrf.mxu0
    %v1962 = vadd.f32 %v1849, %v1961
    %1963 = vmatmul.f32.gmra.mxu0 %v1004
    %v1964 = vpop.f32.mrf.mxu0
    %v1965 = vadd.f32 %v1852, %v1964
    %1966 = vmatmul.f32.gmra.mxu0 %v1007
    %v1967 = vpop.f32.mrf.mxu0
    %v1968 = vadd.f32 %v1855, %v1967
    %1969 = vmatmul.f32.gmra.mxu0 %v1009
    %v1970 = vpop.f32.mrf.mxu0
    %v1971 = vadd.f32 %v1858, %v1970
    %1972 = vmatmul.f32.gmra.mxu0 %v1012
    %v1973 = vpop.f32.mrf.mxu0
    %v1974 = vadd.f32 %v1861, %v1973
    %1975 = vmatmul.f32.gmra.mxu0 %v1014
    %v1976 = vpop.f32.mrf.mxu0
    %v1977 = vadd.f32 %v1864, %v1976
    %1978 = vmatmul.f32.gmra.mxu0 %v1017
    %v1979 = vpop.f32.mrf.mxu0
    %v1980 = vadd.f32 %v1867, %v1979
    %1981 = vmatmul.f32.gmra.mxu0 %v1019
    %v1982 = vpop.f32.mrf.mxu0
    %v1983 = vadd.f32 %v1870, %v1982
    %1984 = vmatmul.f32.gmra.mxu0 %v1022
    %v1985 = vpop.f32.mrf.mxu0
    %v1986 = vadd.f32 %v1873, %v1985
    %1987 = vmatmul.f32.gmra.mxu0 %v1024
    %v1988 = vpop.f32.mrf.mxu0
    %v1989 = vadd.f32 %v1876, %v1988
    %1990 = vmatmul.f32.gmra.mxu0 %v1027
    %v1991 = vpop.f32.mrf.mxu0
    %v1992 = vadd.f32 %v1879, %v1991
    %1993 = vmatmul.f32.gmra.mxu0 %v1029
    %v1994 = vpop.f32.mrf.mxu0
    %v1995 = vadd.f32 %v1882, %v1994
    %1996 = vmatmul.f32.gmra.mxu0 %v1032
    %v1997 = vpop.f32.mrf.mxu0
    %v1998 = vadd.f32 %v1885, %v1997
    %1999 = vmatmul.f32.gmra.mxu0 %v1034
    %v2000 = vpop.f32.mrf.mxu0
    %v2001 = vadd.f32 %v1888, %v2000
    %2002 = vmatmul.f32.gmra.mxu0 %v1037
    %v2003 = vpop.f32.mrf.mxu0
    %v2004 = vadd.f32 %v1891, %v2003
    %2005 = vmatmul.f32.gmra.mxu0 %v1039
    %v2006 = vpop.f32.mrf.mxu0
    %v2007 = vadd.f32 %v1894, %v2006
    %2008 = vdwg.mxu0
    %v2009 = vld [vmem:[%s8] sm:$0x1]
    %v2011 = vperm.slane %v2009, 0
    %v2013 = vadd.f32 %v1914, %v2011
    %v2014 = vadd.f32 %v1917, %v2011
    %v2015 = vadd.f32 %v1920, %v2011
    %v2016 = vadd.f32 %v1923, %v2011
    %v2017 = vadd.f32 %v1926, %v2011
    %v2018 = vadd.f32 %v1929, %v2011
    %v2019 = vadd.f32 %v1932, %v2011
    %v2020 = vadd.f32 %v1935, %v2011
    %v2021 = vadd.f32 %v1938, %v2011
    %v2022 = vadd.f32 %v1941, %v2011
    %v2023 = vadd.f32 %v1944, %v2011
    %v2024 = vadd.f32 %v1947, %v2011
    %v2025 = vadd.f32 %v1950, %v2011
    %v2026 = vadd.f32 %v1953, %v2011
    %v2027 = vadd.f32 %v1956, %v2011
    %v2028 = vadd.f32 %v1959, %v2011
    %v2029 = vadd.f32 %v1962, %v2011
    %v2030 = vadd.f32 %v1965, %v2011
    %v2031 = vadd.f32 %v1968, %v2011
    %v2032 = vadd.f32 %v1971, %v2011
    %v2033 = vadd.f32 %v1974, %v2011
    %v2034 = vadd.f32 %v1977, %v2011
    %v2035 = vadd.f32 %v1980, %v2011
    %v2036 = vadd.f32 %v1983, %v2011
    %v2037 = vadd.f32 %v1986, %v2011
    %v2038 = vadd.f32 %v1989, %v2011
    %v2039 = vadd.f32 %v1992, %v2011
    %v2040 = vadd.f32 %v1995, %v2011
    %v2041 = vadd.f32 %v1998, %v2011
    %v2042 = vadd.f32 %v2001, %v2011
    %v2043 = vadd.f32 %v2004, %v2011
    %v2044 = vadd.f32 %v2007, %v2011
    %vm2045 = vcmask 64512
    %v2046 = vsel %vm2045, %v2013, -inf
    %2047 = vmax.xlane.f32.xlu0 %v2046
    %v2048 = vpop.xlane.xlu0 %2047
    %v2049 = vsel %vm2045, %v2014, -inf
    %2050 = vmax.xlane.f32.xlu0 %v2049
    %v2051 = vpop.xlane.xlu0 %2050
    %v2052 = vsel %vm2045, %v2015, -inf
    %2053 = vmax.xlane.f32.xlu0 %v2052
    %v2054 = vpop.xlane.xlu0 %2053
    %v2055 = vsel %vm2045, %v2016, -inf
    %2056 = vmax.xlane.f32.xlu0 %v2055
    %v2057 = vpop.xlane.xlu0 %2056
    %v2058 = vsel %vm2045, %v2017, -inf
    %2059 = vmax.xlane.f32.xlu0 %v2058
    %v2060 = vpop.xlane.xlu0 %2059
    %v2061 = vsel %vm2045, %v2018, -inf
    %2062 = vmax.xlane.f32.xlu0 %v2061
    %v2063 = vpop.xlane.xlu0 %2062
    %v2064 = vsel %vm2045, %v2019, -inf
    %2065 = vmax.xlane.f32.xlu0 %v2064
    %v2066 = vpop.xlane.xlu0 %2065
    %v2067 = vsel %vm2045, %v2020, -inf
    %2068 = vmax.xlane.f32.xlu0 %v2067
    %v2069 = vpop.xlane.xlu0 %2068
    %v2070 = vsel %vm2045, %v2021, -inf
    %2071 = vmax.xlane.f32.xlu0 %v2070
    %v2072 = vpop.xlane.xlu0 %2071
    %v2073 = vsel %vm2045, %v2022, -inf
    %2074 = vmax.xlane.f32.xlu0 %v2073
    %v2075 = vpop.xlane.xlu0 %2074
    %v2076 = vsel %vm2045, %v2023, -inf
    %2077 = vmax.xlane.f32.xlu0 %v2076
    %v2078 = vpop.xlane.xlu0 %2077
    %v2079 = vsel %vm2045, %v2024, -inf
    %2080 = vmax.xlane.f32.xlu0 %v2079
    %v2081 = vpop.xlane.xlu0 %2080
    %v2082 = vsel %vm2045, %v2025, -inf
    %2083 = vmax.xlane.f32.xlu0 %v2082
    %v2084 = vpop.xlane.xlu0 %2083
    %v2085 = vsel %vm2045, %v2026, -inf
    %2086 = vmax.xlane.f32.xlu0 %v2085
    %v2087 = vpop.xlane.xlu0 %2086
    %v2088 = vsel %vm2045, %v2027, -inf
    %2089 = vmax.xlane.f32.xlu0 %v2088
    %v2090 = vpop.xlane.xlu0 %2089
    %v2091 = vsel %vm2045, %v2028, -inf
    %2092 = vmax.xlane.f32.xlu0 %v2091
    %v2093 = vpop.xlane.xlu0 %2092
    %v2094 = vsel %vm2045, %v2029, -inf
    %2095 = vmax.xlane.f32.xlu0 %v2094
    %v2096 = vpop.xlane.xlu0 %2095
    %v2097 = vsel %vm2045, %v2030, -inf
    %2098 = vmax.xlane.f32.xlu0 %v2097
    %v2099 = vpop.xlane.xlu0 %2098
    %v2100 = vsel %vm2045, %v2031, -inf
    %2101 = vmax.xlane.f32.xlu0 %v2100
    %v2102 = vpop.xlane.xlu0 %2101
    %v2103 = vsel %vm2045, %v2032, -inf
    %2104 = vmax.xlane.f32.xlu0 %v2103
    %v2105 = vpop.xlane.xlu0 %2104
    %v2106 = vsel %vm2045, %v2033, -inf
    %2107 = vmax.xlane.f32.xlu0 %v2106
    %v2108 = vpop.xlane.xlu0 %2107
    %v2109 = vsel %vm2045, %v2034, -inf
    %2110 = vmax.xlane.f32.xlu0 %v2109
    %v2111 = vpop.xlane.xlu0 %2110
    %v2112 = vsel %vm2045, %v2035, -inf
    %2113 = vmax.xlane.f32.xlu0 %v2112
    %v2114 = vpop.xlane.xlu0 %2113
    %v2115 = vsel %vm2045, %v2036, -inf
    %2116 = vmax.xlane.f32.xlu0 %v2115
    %v2117 = vpop.xlane.xlu0 %2116
    %v2118 = vsel %vm2045, %v2037, -inf
    %2119 = vmax.xlane.f32.xlu0 %v2118
    %v2120 = vpop.xlane.xlu0 %2119
    %v2121 = vsel %vm2045, %v2038, -inf
    %2122 = vmax.xlane.f32.xlu0 %v2121
    %v2123 = vpop.xlane.xlu0 %2122
    %v2124 = vsel %vm2045, %v2039, -inf
    %2125 = vmax.xlane.f32.xlu0 %v2124
    %v2126 = vpop.xlane.xlu0 %2125
    %v2127 = vsel %vm2045, %v2040, -inf
    %2128 = vmax.xlane.f32.xlu0 %v2127
    %v2129 = vpop.xlane.xlu0 %2128
    %v2130 = vsel %vm2045, %v2041, -inf
    %2131 = vmax.xlane.f32.xlu0 %v2130
    %v2132 = vpop.xlane.xlu0 %2131
    %v2133 = vsel %vm2045, %v2042, -inf
    %2134 = vmax.xlane.f32.xlu0 %v2133
    %v2135 = vpop.xlane.xlu0 %2134
    %v2136 = vsel %vm2045, %v2043, -inf
    %2137 = vmax.xlane.f32.xlu0 %v2136
    %v2138 = vpop.xlane.xlu0 %2137
    %v2139 = vsel %vm2045, %v2044, -inf
    %2140 = vmax.xlane.f32.xlu0 %v2139
    %v2141 = vpop.xlane.xlu0 %2140
    %v2142 = vsub.f32 %v2013, %v2048
    %v2143 = vsub.f32 %v2014, %v2051
    %v2144 = vsub.f32 %v2015, %v2054
    %v2145 = vsub.f32 %v2016, %v2057
    %v2146 = vsub.f32 %v2017, %v2060
    %v2147 = vsub.f32 %v2018, %v2063
    %v2148 = vsub.f32 %v2019, %v2066
    %v2149 = vsub.f32 %v2020, %v2069
    %v2150 = vsub.f32 %v2021, %v2072
    %v2151 = vsub.f32 %v2022, %v2075
    %v2152 = vsub.f32 %v2023, %v2078
    %v2153 = vsub.f32 %v2024, %v2081
    %v2154 = vsub.f32 %v2025, %v2084
    %v2155 = vsub.f32 %v2026, %v2087
    %v2156 = vsub.f32 %v2027, %v2090
    %v2157 = vsub.f32 %v2028, %v2093
    %v2158 = vsub.f32 %v2029, %v2096
    %v2159 = vsub.f32 %v2030, %v2099
    %v2160 = vsub.f32 %v2031, %v2102
    %v2161 = vsub.f32 %v2032, %v2105
    %v2162 = vsub.f32 %v2033, %v2108
    %v2163 = vsub.f32 %v2034, %v2111
    %v2164 = vsub.f32 %v2035, %v2114
    %v2165 = vsub.f32 %v2036, %v2117
    %v2166 = vsub.f32 %v2037, %v2120
    %v2167 = vsub.f32 %v2038, %v2123
    %v2168 = vsub.f32 %v2039, %v2126
    %v2169 = vsub.f32 %v2040, %v2129
    %v2170 = vsub.f32 %v2041, %v2132
    %v2171 = vsub.f32 %v2042, %v2135
    %v2172 = vsub.f32 %v2043, %v2138
    %v2173 = vsub.f32 %v2044, %v2141
    %v2174 = vmul.f32 %v2142, 1.442695
    %v2175 = vpow.pop %v2174
    %v2176 = vmul.f32 %v2143, 1.442695
    %v2177 = vpow.pop %v2176
    %v2178 = vmul.f32 %v2144, 1.442695
    %v2179 = vpow.pop %v2178
    %v2180 = vmul.f32 %v2145, 1.442695
    %v2181 = vpow.pop %v2180
    %v2182 = vmul.f32 %v2146, 1.442695
    %v2183 = vpow.pop %v2182
    %v2184 = vmul.f32 %v2147, 1.442695
    %v2185 = vpow.pop %v2184
    %v2186 = vmul.f32 %v2148, 1.442695
    %v2187 = vpow.pop %v2186
    %v2188 = vmul.f32 %v2149, 1.442695
    %v2189 = vpow.pop %v2188
    %v2190 = vmul.f32 %v2150, 1.442695
    %v2191 = vpow.pop %v2190
    %v2192 = vmul.f32 %v2151, 1.442695
    %v2193 = vpow.pop %v2192
    %v2194 = vmul.f32 %v2152, 1.442695
    %v2195 = vpow.pop %v2194
    %v2196 = vmul.f32 %v2153, 1.442695
    %v2197 = vpow.pop %v2196
    %v2198 = vmul.f32 %v2154, 1.442695
    %v2199 = vpow.pop %v2198
    %v2200 = vmul.f32 %v2155, 1.442695
    %v2201 = vpow.pop %v2200
    %v2202 = vmul.f32 %v2156, 1.442695
    %v2203 = vpow.pop %v2202
    %v2204 = vmul.f32 %v2157, 1.442695
    %v2205 = vpow.pop %v2204
    %v2206 = vmul.f32 %v2158, 1.442695
    %v2207 = vpow.pop %v2206
    %v2208 = vmul.f32 %v2159, 1.442695
    %v2209 = vpow.pop %v2208
    %v2210 = vmul.f32 %v2160, 1.442695
    %v2211 = vpow.pop %v2210
    %v2212 = vmul.f32 %v2161, 1.442695
    %v2213 = vpow.pop %v2212
    %v2214 = vmul.f32 %v2162, 1.442695
    %v2215 = vpow.pop %v2214
    %v2216 = vmul.f32 %v2163, 1.442695
    %v2217 = vpow.pop %v2216
    %v2218 = vmul.f32 %v2164, 1.442695
    %v2219 = vpow.pop %v2218
    %v2220 = vmul.f32 %v2165, 1.442695
    %v2221 = vpow.pop %v2220
    %v2222 = vmul.f32 %v2166, 1.442695
    %v2223 = vpow.pop %v2222
    %v2224 = vmul.f32 %v2167, 1.442695
    %v2225 = vpow.pop %v2224
    %v2226 = vmul.f32 %v2168, 1.442695
    %v2227 = vpow.pop %v2226
    %v2228 = vmul.f32 %v2169, 1.442695
    %v2229 = vpow.pop %v2228
    %v2230 = vmul.f32 %v2170, 1.442695
    %v2231 = vpow.pop %v2230
    %v2232 = vmul.f32 %v2171, 1.442695
    %v2233 = vpow.pop %v2232
    %v2234 = vmul.f32 %v2172, 1.442695
    %v2235 = vpow.pop %v2234
    %v2236 = vmul.f32 %v2173, 1.442695
    %v2237 = vpow.pop %v2236
    %v2238 = vsel %vm2045, %v2175, 0.0
    %2239 = vadd.xlane.f32.xlu0 %v2238
    %v2240 = vpop.xlane.xlu0 %2239
    %v2241 = vsel %vm2045, %v2177, 0.0
    %2242 = vadd.xlane.f32.xlu0 %v2241
    %v2243 = vpop.xlane.xlu0 %2242
    %v2244 = vsel %vm2045, %v2179, 0.0
    %2245 = vadd.xlane.f32.xlu0 %v2244
    %v2246 = vpop.xlane.xlu0 %2245
    %v2247 = vsel %vm2045, %v2181, 0.0
    %2248 = vadd.xlane.f32.xlu0 %v2247
    %v2249 = vpop.xlane.xlu0 %2248
    %v2250 = vsel %vm2045, %v2183, 0.0
    %2251 = vadd.xlane.f32.xlu0 %v2250
    %v2252 = vpop.xlane.xlu0 %2251
    %v2253 = vsel %vm2045, %v2185, 0.0
    %2254 = vadd.xlane.f32.xlu0 %v2253
    %v2255 = vpop.xlane.xlu0 %2254
    %v2256 = vsel %vm2045, %v2187, 0.0
    %2257 = vadd.xlane.f32.xlu0 %v2256
    %v2258 = vpop.xlane.xlu0 %2257
    %v2259 = vsel %vm2045, %v2189, 0.0
    %2260 = vadd.xlane.f32.xlu0 %v2259
    %v2261 = vpop.xlane.xlu0 %2260
    %v2262 = vsel %vm2045, %v2191, 0.0
    %2263 = vadd.xlane.f32.xlu0 %v2262
    %v2264 = vpop.xlane.xlu0 %2263
    %v2265 = vsel %vm2045, %v2193, 0.0
    %2266 = vadd.xlane.f32.xlu0 %v2265
    %v2267 = vpop.xlane.xlu0 %2266
    %v2268 = vsel %vm2045, %v2195, 0.0
    %2269 = vadd.xlane.f32.xlu0 %v2268
    %v2270 = vpop.xlane.xlu0 %2269
    %v2271 = vsel %vm2045, %v2197, 0.0
    %2272 = vadd.xlane.f32.xlu0 %v2271
    %v2273 = vpop.xlane.xlu0 %2272
    %v2274 = vsel %vm2045, %v2199, 0.0
    %2275 = vadd.xlane.f32.xlu0 %v2274
    %v2276 = vpop.xlane.xlu0 %2275
    %v2277 = vsel %vm2045, %v2201, 0.0
    %2278 = vadd.xlane.f32.xlu0 %v2277
    %v2279 = vpop.xlane.xlu0 %2278
    %v2280 = vsel %vm2045, %v2203, 0.0
    %2281 = vadd.xlane.f32.xlu0 %v2280
    %v2282 = vpop.xlane.xlu0 %2281
    %v2283 = vsel %vm2045, %v2205, 0.0
    %2284 = vadd.xlane.f32.xlu0 %v2283
    %v2285 = vpop.xlane.xlu0 %2284
    %v2286 = vsel %vm2045, %v2207, 0.0
    %2287 = vadd.xlane.f32.xlu0 %v2286
    %v2288 = vpop.xlane.xlu0 %2287
    %v2289 = vsel %vm2045, %v2209, 0.0
    %2290 = vadd.xlane.f32.xlu0 %v2289
    %v2291 = vpop.xlane.xlu0 %2290
    %v2292 = vsel %vm2045, %v2211, 0.0
    %2293 = vadd.xlane.f32.xlu0 %v2292
    %v2294 = vpop.xlane.xlu0 %2293
    %v2295 = vsel %vm2045, %v2213, 0.0
    %2296 = vadd.xlane.f32.xlu0 %v2295
    %v2297 = vpop.xlane.xlu0 %2296
    %v2298 = vsel %vm2045, %v2215, 0.0
    %2299 = vadd.xlane.f32.xlu0 %v2298
    %v2300 = vpop.xlane.xlu0 %2299
    %v2301 = vsel %vm2045, %v2217, 0.0
    %2302 = vadd.xlane.f32.xlu0 %v2301
    %v2303 = vpop.xlane.xlu0 %2302
    %v2304 = vsel %vm2045, %v2219, 0.0
    %2305 = vadd.xlane.f32.xlu0 %v2304
    %v2306 = vpop.xlane.xlu0 %2305
    %v2307 = vsel %vm2045, %v2221, 0.0
    %2308 = vadd.xlane.f32.xlu0 %v2307
    %v2309 = vpop.xlane.xlu0 %2308
    %v2310 = vsel %vm2045, %v2223, 0.0
    %2311 = vadd.xlane.f32.xlu0 %v2310
    %v2312 = vpop.xlane.xlu0 %2311
    %v2313 = vsel %vm2045, %v2225, 0.0
    %2314 = vadd.xlane.f32.xlu0 %v2313
    %v2315 = vpop.xlane.xlu0 %2314
    %v2316 = vsel %vm2045, %v2227, 0.0
    %2317 = vadd.xlane.f32.xlu0 %v2316
    %v2318 = vpop.xlane.xlu0 %2317
    %v2319 = vsel %vm2045, %v2229, 0.0
    %2320 = vadd.xlane.f32.xlu0 %v2319
    %v2321 = vpop.xlane.xlu0 %2320
    %v2322 = vsel %vm2045, %v2231, 0.0
    %2323 = vadd.xlane.f32.xlu0 %v2322
    %v2324 = vpop.xlane.xlu0 %2323
    %v2325 = vsel %vm2045, %v2233, 0.0
    %2326 = vadd.xlane.f32.xlu0 %v2325
    %v2327 = vpop.xlane.xlu0 %2326
    %v2328 = vsel %vm2045, %v2235, 0.0
    %2329 = vadd.xlane.f32.xlu0 %v2328
    %v2330 = vpop.xlane.xlu0 %2329
    %v2331 = vsel %vm2045, %v2237, 0.0
    %2332 = vadd.xlane.f32.xlu0 %v2331
    %v2333 = vpop.xlane.xlu0 %2332
    %v2334 = vlog2.pop %v2240
    %v2335 = vmul.f32 %v2334, 0.6931472
    %v2336 = vlog2.pop %v2243
    %v2337 = vmul.f32 %v2336, 0.6931472
    %v2338 = vlog2.pop %v2246
    %v2339 = vmul.f32 %v2338, 0.6931472
    %v2340 = vlog2.pop %v2249
    %v2341 = vmul.f32 %v2340, 0.6931472
    %v2342 = vlog2.pop %v2252
    %v2343 = vmul.f32 %v2342, 0.6931472
    %v2344 = vlog2.pop %v2255
    %v2345 = vmul.f32 %v2344, 0.6931472
    %v2346 = vlog2.pop %v2258
    %v2347 = vmul.f32 %v2346, 0.6931472
    %v2348 = vlog2.pop %v2261
    %v2349 = vmul.f32 %v2348, 0.6931472
    %v2350 = vlog2.pop %v2264
    %v2351 = vmul.f32 %v2350, 0.6931472
    %v2352 = vlog2.pop %v2267
    %v2353 = vmul.f32 %v2352, 0.6931472
    %v2354 = vlog2.pop %v2270
    %v2355 = vmul.f32 %v2354, 0.6931472
    %v2356 = vlog2.pop %v2273
    %v2357 = vmul.f32 %v2356, 0.6931472
    %v2358 = vlog2.pop %v2276
    %v2359 = vmul.f32 %v2358, 0.6931472
    %v2360 = vlog2.pop %v2279
    %v2361 = vmul.f32 %v2360, 0.6931472
    %v2362 = vlog2.pop %v2282
    %v2363 = vmul.f32 %v2362, 0.6931472
    %v2364 = vlog2.pop %v2285
    %v2365 = vmul.f32 %v2364, 0.6931472
    %v2366 = vlog2.pop %v2288
    %v2367 = vmul.f32 %v2366, 0.6931472
    %v2368 = vlog2.pop %v2291
    %v2369 = vmul.f32 %v2368, 0.6931472
    %v2370 = vlog2.pop %v2294
    %v2371 = vmul.f32 %v2370, 0.6931472
    %v2372 = vlog2.pop %v2297
    %v2373 = vmul.f32 %v2372, 0.6931472
    %v2374 = vlog2.pop %v2300
    %v2375 = vmul.f32 %v2374, 0.6931472
    %v2376 = vlog2.pop %v2303
    %v2377 = vmul.f32 %v2376, 0.6931472
    %v2378 = vlog2.pop %v2306
    %v2379 = vmul.f32 %v2378, 0.6931472
    %v2380 = vlog2.pop %v2309
    %v2381 = vmul.f32 %v2380, 0.6931472
    %v2382 = vlog2.pop %v2312
    %v2383 = vmul.f32 %v2382, 0.6931472
    %v2384 = vlog2.pop %v2315
    %v2385 = vmul.f32 %v2384, 0.6931472
    %v2386 = vlog2.pop %v2318
    %v2387 = vmul.f32 %v2386, 0.6931472
    %v2388 = vlog2.pop %v2321
    %v2389 = vmul.f32 %v2388, 0.6931472
    %v2390 = vlog2.pop %v2324
    %v2391 = vmul.f32 %v2390, 0.6931472
    %v2392 = vlog2.pop %v2327
    %v2393 = vmul.f32 %v2392, 0.6931472
    %v2394 = vlog2.pop %v2330
    %v2395 = vmul.f32 %v2394, 0.6931472
    %v2396 = vlog2.pop %v2333
    %v2397 = vmul.f32 %v2396, 0.6931472
    %v2398 = vsub.f32 %v2142, %v2335
    %v2399 = vsub.f32 %v2143, %v2337
    %v2400 = vsub.f32 %v2144, %v2339
    %v2401 = vsub.f32 %v2145, %v2341
    %v2402 = vsub.f32 %v2146, %v2343
    %v2403 = vsub.f32 %v2147, %v2345
    %v2404 = vsub.f32 %v2148, %v2347
    %v2405 = vsub.f32 %v2149, %v2349
    %v2406 = vsub.f32 %v2150, %v2351
    %v2407 = vsub.f32 %v2151, %v2353
    %v2408 = vsub.f32 %v2152, %v2355
    %v2409 = vsub.f32 %v2153, %v2357
    %v2410 = vsub.f32 %v2154, %v2359
    %v2411 = vsub.f32 %v2155, %v2361
    %v2412 = vsub.f32 %v2156, %v2363
    %v2413 = vsub.f32 %v2157, %v2365
    %v2414 = vsub.f32 %v2158, %v2367
    %v2415 = vsub.f32 %v2159, %v2369
    %v2416 = vsub.f32 %v2160, %v2371
    %v2417 = vsub.f32 %v2161, %v2373
    %v2418 = vsub.f32 %v2162, %v2375
    %v2419 = vsub.f32 %v2163, %v2377
    %v2420 = vsub.f32 %v2164, %v2379
    %v2421 = vsub.f32 %v2165, %v2381
    %v2422 = vsub.f32 %v2166, %v2383
    %v2423 = vsub.f32 %v2167, %v2385
    %v2424 = vsub.f32 %v2168, %v2387
    %v2425 = vsub.f32 %v2169, %v2389
    %v2426 = vsub.f32 %v2170, %v2391
    %v2427 = vsub.f32 %v2171, %v2393
    %v2428 = vsub.f32 %v2172, %v2395
    %v2429 = vsub.f32 %v2173, %v2397
    %2430 = vst.msk [vmem:[%s9] sm:$0xff] %vm2045, %v2398
    %2431 = vst.msk [vmem:[%s9 + $0x8] sm:$0xff] %vm2045, %v2399
    %2432 = vst.msk [vmem:[%s9 + $0x10] sm:$0xff] %vm2045, %v2400
    %2433 = vst.msk [vmem:[%s9 + $0x18] sm:$0xff] %vm2045, %v2401
    %2434 = vst.msk [vmem:[%s9 + $0x20] sm:$0xff] %vm2045, %v2402
    %2435 = vst.msk [vmem:[%s9 + $0x28] sm:$0xff] %vm2045, %v2403
    %2436 = vst.msk [vmem:[%s9 + $0x30] sm:$0xff] %vm2045, %v2404
    %2437 = vst.msk [vmem:[%s9 + $0x38] sm:$0xff] %vm2045, %v2405
    %2438 = vst.msk [vmem:[%s9 + $0x40] sm:$0xff] %vm2045, %v2406
    %2439 = vst.msk [vmem:[%s9 + $0x48] sm:$0xff] %vm2045, %v2407
    %2440 = vst.msk [vmem:[%s9 + $0x50] sm:$0xff] %vm2045, %v2408
    %2441 = vst.msk [vmem:[%s9 + $0x58] sm:$0xff] %vm2045, %v2409
    %2442 = vst.msk [vmem:[%s9 + $0x60] sm:$0xff] %vm2045, %v2410
    %2443 = vst.msk [vmem:[%s9 + $0x68] sm:$0xff] %vm2045, %v2411
    %2444 = vst.msk [vmem:[%s9 + $0x70] sm:$0xff] %vm2045, %v2412
    %2445 = vst.msk [vmem:[%s9 + $0x78] sm:$0xff] %vm2045, %v2413
    %2446 = vst.msk [vmem:[%s9 + $0x80] sm:$0xff] %vm2045, %v2414
    %2447 = vst.msk [vmem:[%s9 + $0x88] sm:$0xff] %vm2045, %v2415
    %2448 = vst.msk [vmem:[%s9 + $0x90] sm:$0xff] %vm2045, %v2416
    %2449 = vst.msk [vmem:[%s9 + $0x98] sm:$0xff] %vm2045, %v2417
    %2450 = vst.msk [vmem:[%s9 + $0xa0] sm:$0xff] %vm2045, %v2418
    %2451 = vst.msk [vmem:[%s9 + $0xa8] sm:$0xff] %vm2045, %v2419
    %2452 = vst.msk [vmem:[%s9 + $0xb0] sm:$0xff] %vm2045, %v2420
    %2453 = vst.msk [vmem:[%s9 + $0xb8] sm:$0xff] %vm2045, %v2421
    %2454 = vst.msk [vmem:[%s9 + $0xc0] sm:$0xff] %vm2045, %v2422
    %2455 = vst.msk [vmem:[%s9 + $0xc8] sm:$0xff] %vm2045, %v2423
    %2456 = vst.msk [vmem:[%s9 + $0xd0] sm:$0xff] %vm2045, %v2424
    %2457 = vst.msk [vmem:[%s9 + $0xd8] sm:$0xff] %vm2045, %v2425
    %2458 = vst.msk [vmem:[%s9 + $0xe0] sm:$0xff] %vm2045, %v2426
    %2459 = vst.msk [vmem:[%s9 + $0xe8] sm:$0xff] %vm2045, %v2427
    %2460 = vst.msk [vmem:[%s9 + $0xf0] sm:$0xff] %vm2045, %v2428
    %2461 = vst.msk [vmem:[%s9 + $0xf8] sm:$0xff] %vm2045, %v2429
    // Predicated region
    $region42: #{tpu_custom_call.1} parent=1 // pred_check
      _
    $region43: #{tpu_custom_call.1} parent=1 // pred_check_branch
      %2463 = sbr.rel (0) target = $region45
    $region44: #{tpu_custom_call.1} parent=1 // pred_region
      _
    $region45: #{tpu_custom_call.1} parent=1 // pred_fallthru
      _
    // Predicated region
    $region46: #{tpu_custom_call.1} parent=1 // pred_check
      _
    $region47: #{tpu_custom_call.1} parent=1 // pred_check_branch
      %2465 = sbr.rel (0) target = $region49
    $region48: #{tpu_custom_call.1} parent=1 // pred_region
      _
    $region49: #{tpu_custom_call.1} parent=1 // pred_fallthru
      _
    %2466 = vsyncpa [#allocation3], 1

</llo_original>
